<compile_context>
chip_gen: v7x
topology: tpu7x:2x2x1
jax: 0.10.0
libtpu: 0.0.40
codegen_flags: <defaults>
</compile_context>

<pallas_src>
import jax
import jax.numpy as jnp
from jax.experimental import pallas as pl
from jax.experimental.pallas import tpu as pltpu

# ----------------------------- model config ---------------------------------
BATCH = 2
SEQ = 8
TOKENS = BATCH * SEQ
HIDDEN = 32
N_HEADS = 2
HEAD_DIM = HIDDEN // N_HEADS
INTERMEDIATE = 64
N_LAYERS = 2
VOCAB = 100
TYPE_VOCAB = 2
MAX_POS = 16
N_CLS = 3
CLS_HIDDEN = 256
LN_EPS = 1e-12


# ------------------------------ fused kernel --------------------------------
def _bert_fwd_kernel(
    emb_ref,                       # [T, H]      embeddings, all tokens
    mask_ref,                      # [T, T]      additive (block-diag + pad) mask
    emb_ln_g_ref, emb_ln_b_ref,    # [1, H]
    wqkv_ref, bqkv_ref,            # [L, H, 3H] bf16, [L, 1, 3H] f32
    wo_ref, bo_ref,                # [L, H, H]  bf16, [L, 1, H]  f32
    ln1_g_ref, ln1_b_ref,          # [L, 1, H]
    wi_ref, bi_ref,                # [L, H, I]  bf16, [L, 1, I]  f32
    wf_ref, bf_ref,                # [L, I, H]  bf16, [L, 1, H]  f32
    ln2_g_ref, ln2_b_ref,          # [L, 1, H]
    pool_w_ref, pool_b_ref,        # [H, H] bf16, [1, H] f32
    cls_w1_ref, cls_b1_ref,        # [H, 256] bf16, [1, 256] f32
    cls_w2_ref, cls_b2_ref,        # [256, N_CLS] bf16, [1, N_CLS] f32
    logits_ref,                    # [B, N_CLS]
):
    scale = 1.0 / (HEAD_DIM ** 0.5)

    def mm(a, b):
        # bf16 MXU operands, f32 accumulation (weights already bf16 in HBM).
        return jnp.dot(a.astype(jnp.bfloat16), b.astype(jnp.bfloat16),
                       preferred_element_type=jnp.float32)

    def mm_nt(a, b):
        # a @ b.T without materializing a transpose (contract last dims).
        return jax.lax.dot_general(
            a.astype(jnp.bfloat16), b.astype(jnp.bfloat16),
            dimension_numbers=(((1,), (1,)), ((), ())),
            preferred_element_type=jnp.float32)

    def layernorm(x, g, b):
        mu = jnp.mean(x, axis=-1, keepdims=True)
        xc = x - mu
        var = jnp.mean(xc * xc, axis=-1, keepdims=True)
        return xc * jax.lax.rsqrt(var + LN_EPS) * g + b

    x = emb_ref[...].astype(jnp.float32)                     # [T, H]
    x = layernorm(x, emb_ln_g_ref[...], emb_ln_b_ref[...])
    mask2d = mask_ref[...]                                   # [T, T]
    # TODO(synk): embedding / hidden / classifier dropout omitted (eval mode).

    for l in range(N_LAYERS):
        # ---- self-attention (fused QKV projection, all batch rows at once) ----
        qkv = mm(x, wqkv_ref[l]) + bqkv_ref[l]               # [T, 3H] f32
        head_outs = []
        for h in range(N_HEADS):
            lo = h * HEAD_DIM
            hi = lo + HEAD_DIM
            qh = qkv[:, lo:hi]                               # [T, D]
            kh = qkv[:, HIDDEN + lo:HIDDEN + hi]             # [T, D]
            vh = qkv[:, 2 * HIDDEN + lo:2 * HIDDEN + hi]     # [T, D]
            # Block-diagonal mask keeps attention within each batch row.
            s = mm_nt(qh, kh) * scale + mask2d               # [T, T]
            m = jnp.max(s, axis=-1, keepdims=True)
            p = jnp.exp(s - m)
            p = p * pl.reciprocal(jnp.sum(p, axis=-1, keepdims=True), approx=True)
            head_outs.append(mm(p, vh))                      # [T, D]
        ctx = jnp.concatenate(head_outs, axis=1)             # [T, H]
        attn_out = mm(ctx, wo_ref[l]) + bo_ref[l]            # [T, H]
        # residual add folded into the LayerNorm
        x = layernorm(x + attn_out, ln1_g_ref[l], ln1_b_ref[l])

        # ---- feed-forward ----
        hmid = mm(x, wi_ref[l]) + bi_ref[l]
        # TODO(synk): HF BERT uses exact (erf) GELU; tanh-approximate GELU used
        # here since lax.erf lowering in Mosaic is not guaranteed.
        hmid = jax.nn.gelu(hmid, approximate=True)
        ff = mm(hmid, wf_ref[l]) + bf_ref[l]
        x = layernorm(x + ff, ln2_g_ref[l], ln2_b_ref[l])

    # ---- pooler (CLS token of each batch row) + classifier head, fused ----
    cls_tok = jnp.concatenate(
        [x[b * SEQ:b * SEQ + 1, :] for b in range(BATCH)], axis=0)   # [B, H]
    pooled = jnp.tanh(mm(cls_tok, pool_w_ref[...]) + pool_b_ref[...])
    hcls = jnp.maximum(mm(pooled, cls_w1_ref[...]) + cls_b1_ref[...], 0.0)
    logits = mm(hcls, cls_w2_ref[...]) + cls_b2_ref[...]             # [B, N_CLS]
    logits_ref[...] = logits.astype(logits_ref.dtype)


def _rep_spec(a):
    """Full-array block, same block every grid step (weights stay resident)."""
    zeros = (0,) * a.ndim
    return pl.BlockSpec(a.shape, lambda i, _z=zeros: _z)


def _fused_forward(emb_flat, mask2d, p):
    weight_args = (
        p["emb_ln_g"], p["emb_ln_b"],
        p["wqkv"], p["bqkv"], p["wo"], p["bo"], p["ln1_g"], p["ln1_b"],
        p["wi"], p["bi"], p["wf"], p["bf"], p["ln2_g"], p["ln2_b"],
        p["pool_w"], p["pool_b"],
        p["cls_w1"], p["cls_b1"], p["cls_w2"], p["cls_b2"],
    )
    in_specs = [
        pl.BlockSpec((TOKENS, HIDDEN), lambda i: (0, 0)),   # flattened embeddings
        pl.BlockSpec((TOKENS, TOKENS), lambda i: (0, 0)),   # additive attn mask
    ] + [_rep_spec(a) for a in weight_args]
    out_specs = pl.BlockSpec((BATCH, N_CLS), lambda i: (0, 0))

    grid_spec = pltpu.PrefetchScalarGridSpec(
        num_scalar_prefetch=0,
        grid=(1,),                 # whole batch in a single invocation
        in_specs=in_specs,
        out_specs=out_specs,
    )
    return pl.pallas_call(
        _bert_fwd_kernel,
        out_shape=jax.ShapeDtypeStruct((BATCH, N_CLS), jnp.float32),
        grid_spec=grid_spec,
        compiler_params=pltpu.CompilerParams(
            dimension_semantics=("arbitrary",),
        ),
    )(emb_flat, mask2d, *weight_args)


# ----------------------------- parameter init -------------------------------
def init_params(key):
    def nrm(k, shape, scale=0.02):
        return scale * jax.random.normal(k, shape, dtype=jnp.float32)

    keys = iter(jax.random.split(key, 32))
    p = {
        "word_emb": nrm(next(keys), (VOCAB, HIDDEN)),
        "pos_emb": nrm(next(keys), (MAX_POS, HIDDEN)),
        "type_emb": nrm(next(keys), (TYPE_VOCAB, HIDDEN)),
        "emb_ln_g": jnp.ones((1, HIDDEN), jnp.float32),
        "emb_ln_b": jnp.zeros((1, HIDDEN), jnp.float32),
        # Matmul weights stored as bf16: the MXU path uses bf16 operands anyway,
        # so this halves the weight DMA bytes (the dominant traffic here).
        "pool_w": nrm(next(keys), (HIDDEN, HIDDEN)).astype(jnp.bfloat16),
        "pool_b": jnp.zeros((1, HIDDEN), jnp.float32),
        "cls_w1": nrm(next(keys), (HIDDEN, CLS_HIDDEN)).astype(jnp.bfloat16),
        "cls_b1": jnp.zeros((1, CLS_HIDDEN), jnp.float32),
        "cls_w2": nrm(next(keys), (CLS_HIDDEN, N_CLS)).astype(jnp.bfloat16),
        "cls_b2": jnp.zeros((1, N_CLS), jnp.float32),
    }
    wqkv, wo, wi, wf = [], [], [], []
    for _ in range(N_LAYERS):
        wq = nrm(next(keys), (HIDDEN, HIDDEN))
        wk = nrm(next(keys), (HIDDEN, HIDDEN))
        wv = nrm(next(keys), (HIDDEN, HIDDEN))
        wqkv.append(jnp.concatenate([wq, wk, wv], axis=1))   # fused QKV weight
        wo.append(nrm(next(keys), (HIDDEN, HIDDEN)))
        wi.append(nrm(next(keys), (HIDDEN, INTERMEDIATE)))
        wf.append(nrm(next(keys), (INTERMEDIATE, HIDDEN)))
    p["wqkv"] = jnp.stack(wqkv).astype(jnp.bfloat16)                 # [L, H, 3H]
    p["bqkv"] = jnp.zeros((N_LAYERS, 1, 3 * HIDDEN), jnp.float32)
    p["wo"] = jnp.stack(wo).astype(jnp.bfloat16)                     # [L, H, H]
    p["bo"] = jnp.zeros((N_LAYERS, 1, HIDDEN), jnp.float32)
    p["ln1_g"] = jnp.ones((N_LAYERS, 1, HIDDEN), jnp.float32)
    p["ln1_b"] = jnp.zeros((N_LAYERS, 1, HIDDEN), jnp.float32)
    p["wi"] = jnp.stack(wi).astype(jnp.bfloat16)                     # [L, H, I]
    p["bi"] = jnp.zeros((N_LAYERS, 1, INTERMEDIATE), jnp.float32)
    p["wf"] = jnp.stack(wf).astype(jnp.bfloat16)                     # [L, I, H]
    p["bf"] = jnp.zeros((N_LAYERS, 1, HIDDEN), jnp.float32)
    p["ln2_g"] = jnp.ones((N_LAYERS, 1, HIDDEN), jnp.float32)
    p["ln2_b"] = jnp.zeros((N_LAYERS, 1, HIDDEN), jnp.float32)
    return p


# ------------------------------ forward pass ---------------------------------
@jax.jit
def bert_classifier_forward(params, input_ids, attention_mask, token_type_ids):
    B, S = input_ids.shape
    pos_ids = jnp.arange(S)
    # Embedding table gathers are plain JAX glue; everything after runs in the
    # single fused Pallas kernel.
    emb = (params["word_emb"][input_ids]
           + params["pos_emb"][pos_ids][None, :, :]
           + params["type_emb"][token_type_ids])                     # [B, S, H]
    emb_flat = emb.reshape(B * S, HIDDEN)                            # [T, H]

    # Block-diagonal additive attention mask over the flattened token axis:
    # a query may only attend to non-padded keys of its own batch row.
    batch_id = jnp.repeat(jnp.arange(B), S)                          # [T]
    same_row = batch_id[:, None] == batch_id[None, :]                # [T, T]
    key_valid = (attention_mask.reshape(-1) > 0)[None, :]            # [1, T]
    mask2d = jnp.where(same_row & key_valid, 0.0, -1e9).astype(jnp.float32)

    return _fused_forward(emb_flat, mask2d, params)                  # [B, N_CLS]


# --------------------------------- main --------------------------------------
if __name__ == "__main__":
    key = jax.random.PRNGKey(0)
    k_param, k_ids = jax.random.split(key, 2)

    params = init_params(k_param)
    input_ids = jax.random.randint(k_ids, (BATCH, SEQ), 0, VOCAB, dtype=jnp.int32)
    token_type_ids = jnp.zeros((BATCH, SEQ), dtype=jnp.int32)
    attention_mask = jnp.ones((BATCH, SEQ), dtype=jnp.int32)

    logits = bert_classifier_forward(params, input_ids, attention_mask,
                                     token_type_ids)
    logits = jax.block_until_ready(logits)
    assert logits.shape == (BATCH, N_CLS)
    assert bool(jnp.all(jnp.isfinite(logits)))
    print("KERNEL_OK")
</pallas_src>

<mosaic_0001>
module attributes {stable_mosaic.version = 11 : i64} {
  func.func @_bert_fwd_kernel(%arg0: i32, %arg1: memref<16x32xf32, #tpu.memory_space<vmem>>, %arg2: memref<16x16xf32, #tpu.memory_space<vmem>>, %arg3: memref<1x32xf32, #tpu.memory_space<vmem>>, %arg4: memref<1x32xf32, #tpu.memory_space<vmem>>, %arg5: memref<2x32x96xbf16, #tpu.memory_space<vmem>>, %arg6: memref<2x1x96xf32, #tpu.memory_space<vmem>>, %arg7: memref<2x32x32xbf16, #tpu.memory_space<vmem>>, %arg8: memref<2x1x32xf32, #tpu.memory_space<vmem>>, %arg9: memref<2x1x32xf32, #tpu.memory_space<vmem>>, %arg10: memref<2x1x32xf32, #tpu.memory_space<vmem>>, %arg11: memref<2x32x64xbf16, #tpu.memory_space<vmem>>, %arg12: memref<2x1x64xf32, #tpu.memory_space<vmem>>, %arg13: memref<2x64x32xbf16, #tpu.memory_space<vmem>>, %arg14: memref<2x1x32xf32, #tpu.memory_space<vmem>>, %arg15: memref<2x1x32xf32, #tpu.memory_space<vmem>>, %arg16: memref<2x1x32xf32, #tpu.memory_space<vmem>>, %arg17: memref<32x32xbf16, #tpu.memory_space<vmem>>, %arg18: memref<1x32xf32, #tpu.memory_space<vmem>>, %arg19: memref<32x256xbf16, #tpu.memory_space<vmem>>, %arg20: memref<1x256xf32, #tpu.memory_space<vmem>>, %arg21: memref<256x3xbf16, #tpu.memory_space<vmem>>, %arg22: memref<1x3xf32, #tpu.memory_space<vmem>>, %arg23: memref<2x3xf32, #tpu.memory_space<vmem>>) attributes {dimension_semantics = [#tpu.dimension_semantics<arbitrary>], iteration_bounds = array<i64: 1>, scalar_prefetch = 0 : i64, scratch_operands = 0 : i64, tpu.core_type = #tpu.core_type<tc>, window_params = [{pipeline_mode = #tpu.pipeline_mode<synchronous>, transform_indices = @transform_0, window_bounds = array<i64: 16, 32>}, {pipeline_mode = #tpu.pipeline_mode<synchronous>, transform_indices = @transform_1, window_bounds = array<i64: 16, 16>}, {pipeline_mode = #tpu.pipeline_mode<synchronous>, transform_indices = @transform_2, window_bounds = array<i64: 1, 32>}, {pipeline_mode = #tpu.pipeline_mode<synchronous>, transform_indices = @transform_3, window_bounds = array<i64: 1, 32>}, {pipeline_mode = #tpu.pipeline_mode<synchronous>, transform_indices = @transform_4, window_bounds = array<i64: 2, 32, 96>}, {pipeline_mode = #tpu.pipeline_mode<synchronous>, transform_indices = @transform_5, window_bounds = array<i64: 2, 1, 96>}, {pipeline_mode = #tpu.pipeline_mode<synchronous>, transform_indices = @transform_6, window_bounds = array<i64: 2, 32, 32>}, {pipeline_mode = #tpu.pipeline_mode<synchronous>, transform_indices = @transform_7, window_bounds = array<i64: 2, 1, 32>}, {pipeline_mode = #tpu.pipeline_mode<synchronous>, transform_indices = @transform_8, window_bounds = array<i64: 2, 1, 32>}, {pipeline_mode = #tpu.pipeline_mode<synchronous>, transform_indices = @transform_9, window_bounds = array<i64: 2, 1, 32>}, {pipeline_mode = #tpu.pipeline_mode<synchronous>, transform_indices = @transform_10, window_bounds = array<i64: 2, 32, 64>}, {pipeline_mode = #tpu.pipeline_mode<synchronous>, transform_indices = @transform_11, window_bounds = array<i64: 2, 1, 64>}, {pipeline_mode = #tpu.pipeline_mode<synchronous>, transform_indices = @transform_12, window_bounds = array<i64: 2, 64, 32>}, {pipeline_mode = #tpu.pipeline_mode<synchronous>, transform_indices = @transform_13, window_bounds = array<i64: 2, 1, 32>}, {pipeline_mode = #tpu.pipeline_mode<synchronous>, transform_indices = @transform_14, window_bounds = array<i64: 2, 1, 32>}, {pipeline_mode = #tpu.pipeline_mode<synchronous>, transform_indices = @transform_15, window_bounds = array<i64: 2, 1, 32>}, {pipeline_mode = #tpu.pipeline_mode<synchronous>, transform_indices = @transform_16, window_bounds = array<i64: 32, 32>}, {pipeline_mode = #tpu.pipeline_mode<synchronous>, transform_indices = @transform_17, window_bounds = array<i64: 1, 32>}, {pipeline_mode = #tpu.pipeline_mode<synchronous>, transform_indices = @transform_18, window_bounds = array<i64: 32, 256>}, {pipeline_mode = #tpu.pipeline_mode<synchronous>, transform_indices = @transform_19, window_bounds = array<i64: 1, 256>}, {pipeline_mode = #tpu.pipeline_mode<synchronous>, transform_indices = @transform_20, window_bounds = array<i64: 256, 3>}, {pipeline_mode = #tpu.pipeline_mode<synchronous>, transform_indices = @transform_21, window_bounds = array<i64: 1, 3>}, {pipeline_mode = #tpu.pipeline_mode<synchronous>, transform_indices = @transform_22, window_bounds = array<i64: 2, 3>}]} {
    %c0 = arith.constant 0 : index
    %c0_0 = arith.constant 0 : index
    %0 = vector.load %arg1[%c0, %c0_0] : memref<16x32xf32, #tpu.memory_space<vmem>>, vector<16x32xf32>
    %c0_1 = arith.constant 0 : index
    %c0_2 = arith.constant 0 : index
    %1 = vector.load %arg3[%c0_1, %c0_2] : memref<1x32xf32, #tpu.memory_space<vmem>>, vector<1x32xf32>
    %c0_3 = arith.constant 0 : index
    %c0_4 = arith.constant 0 : index
    %2 = vector.load %arg4[%c0_3, %c0_4] : memref<1x32xf32, #tpu.memory_space<vmem>>, vector<1x32xf32>
    %cst = arith.constant dense<0.000000e+00> : vector<16xf32>
    %3 = vector.multi_reduction <add>, %0, %cst [1] : vector<16x32xf32> to vector<16xf32>
    %4 = vector.shape_cast %3 : vector<16xf32> to vector<16x1xf32>
    %cst_5 = arith.constant 3.200000e+01 : f32
    %5 = vector.broadcast %cst_5 : f32 to vector<16x1xf32>
    %6 = arith.divf %4, %5 : vector<16x1xf32>
    %7 = vector.broadcast %6 : vector<16x1xf32> to vector<16x32xf32>
    %8 = arith.subf %0, %7 : vector<16x32xf32>
    %9 = arith.mulf %8, %8 : vector<16x32xf32>
    %cst_6 = arith.constant dense<0.000000e+00> : vector<16xf32>
    %10 = vector.multi_reduction <add>, %9, %cst_6 [1] : vector<16x32xf32> to vector<16xf32>
    %11 = vector.shape_cast %10 : vector<16xf32> to vector<16x1xf32>
    %cst_7 = arith.constant 3.200000e+01 : f32
    %12 = vector.broadcast %cst_7 : f32 to vector<16x1xf32>
    %13 = arith.divf %11, %12 : vector<16x1xf32>
    %cst_8 = arith.constant 9.99999996E-13 : f32
    %14 = vector.broadcast %cst_8 : f32 to vector<16x1xf32>
    %15 = arith.addf %13, %14 : vector<16x1xf32>
    %16 = math.rsqrt %15 : vector<16x1xf32>
    %17 = vector.broadcast %16 : vector<16x1xf32> to vector<16x32xf32>
    %18 = arith.mulf %8, %17 : vector<16x32xf32>
    %19 = vector.broadcast %1 : vector<1x32xf32> to vector<16x32xf32>
    %20 = arith.mulf %18, %19 : vector<16x32xf32>
    %21 = vector.broadcast %2 : vector<1x32xf32> to vector<16x32xf32>
    %22 = arith.addf %20, %21 : vector<16x32xf32>
    %c0_9 = arith.constant 0 : index
    %c0_10 = arith.constant 0 : index
    %23 = vector.load %arg2[%c0_9, %c0_10] : memref<16x16xf32, #tpu.memory_space<vmem>>, vector<16x16xf32>
    %c0_11 = arith.constant 0 : index
    %c0_12 = arith.constant 0 : index
    %c0_13 = arith.constant 0 : index
    %24 = vector.load %arg5[%c0_11, %c0_12, %c0_13] : memref<2x32x96xbf16, #tpu.memory_space<vmem>>, vector<1x32x96xbf16>
    %25 = vector.shape_cast %24 : vector<1x32x96xbf16> to vector<32x96xbf16>
    %26 = arith.truncf %22 : vector<16x32xf32> to vector<16x32xbf16>
    %cst_14 = arith.constant dense<0.000000e+00> : vector<16x96xf32>
    %27 = tpu.matmul %26, %25, %cst_14 {dimension_numbers = #tpu.dot_dimension_numbers<[1], [0], [0], [1], [0, 0, 1, 1], [], []>} : vector<16x32xbf16>, vector<32x96xbf16>, vector<16x96xf32> -> vector<16x96xf32>
    %c0_15 = arith.constant 0 : index
    %c0_16 = arith.constant 0 : index
    %c0_17 = arith.constant 0 : index
    %28 = vector.load %arg6[%c0_15, %c0_16, %c0_17] : memref<2x1x96xf32, #tpu.memory_space<vmem>>, vector<1x1x96xf32>
    %29 = vector.shape_cast %28 : vector<1x1x96xf32> to vector<1x96xf32>
    %30 = vector.broadcast %29 : vector<1x96xf32> to vector<16x96xf32>
    %31 = arith.addf %27, %30 : vector<16x96xf32>
    %32 = vector.extract_strided_slice %31 {offsets = [0, 0], sizes = [16, 16], strides = [1, 1]} : vector<16x96xf32> to vector<16x16xf32>
    %33 = vector.extract_strided_slice %31 {offsets = [0, 32], sizes = [16, 16], strides = [1, 1]} : vector<16x96xf32> to vector<16x16xf32>
    %34 = vector.extract_strided_slice %31 {offsets = [0, 64], sizes = [16, 16], strides = [1, 1]} : vector<16x96xf32> to vector<16x16xf32>
    %35 = arith.truncf %32 : vector<16x16xf32> to vector<16x16xbf16>
    %36 = arith.truncf %33 : vector<16x16xf32> to vector<16x16xbf16>
    %cst_18 = arith.constant dense<0.000000e+00> : vector<16x16xf32>
    %37 = tpu.matmul %35, %36, %cst_18 {dimension_numbers = #tpu.dot_dimension_numbers<[1], [1], [0], [0], [0, 0, 1, 0], [], []>} : vector<16x16xbf16>, vector<16x16xbf16>, vector<16x16xf32> -> vector<16x16xf32>
    %cst_19 = arith.constant 2.500000e-01 : f32
    %38 = vector.broadcast %cst_19 : f32 to vector<16x16xf32>
    %39 = arith.mulf %37, %38 : vector<16x16xf32>
    %40 = arith.addf %39, %23 : vector<16x16xf32>
    %cst_20 = arith.constant dense<0xFF800000> : vector<16xf32>
    %41 = vector.multi_reduction <maximumf>, %40, %cst_20 [1] : vector<16x16xf32> to vector<16xf32>
    %42 = vector.shape_cast %41 : vector<16xf32> to vector<16x1xf32>
    %43 = vector.broadcast %42 : vector<16x1xf32> to vector<16x16xf32>
    %44 = arith.subf %40, %43 : vector<16x16xf32>
    %45 = math.exp %44 : vector<16x16xf32>
    %cst_21 = arith.constant dense<0.000000e+00> : vector<16xf32>
    %46 = vector.multi_reduction <add>, %45, %cst_21 [1] : vector<16x16xf32> to vector<16xf32>
    %47 = vector.shape_cast %46 : vector<16xf32> to vector<16x1xf32>
    %48 = tpu.reciprocal %47 {approx = true} : vector<16x1xf32> -> vector<16x1xf32>
    %49 = vector.broadcast %48 : vector<16x1xf32> to vector<16x16xf32>
    %50 = arith.mulf %45, %49 : vector<16x16xf32>
    %51 = arith.truncf %50 : vector<16x16xf32> to vector<16x16xbf16>
    %52 = arith.truncf %34 : vector<16x16xf32> to vector<16x16xbf16>
    %cst_22 = arith.constant dense<0.000000e+00> : vector<16x16xf32>
    %53 = tpu.matmul %51, %52, %cst_22 {dimension_numbers = #tpu.dot_dimension_numbers<[1], [0], [0], [1], [0, 0, 1, 1], [], []>} : vector<16x16xbf16>, vector<16x16xbf16>, vector<16x16xf32> -> vector<16x16xf32>
    %54 = vector.extract_strided_slice %31 {offsets = [0, 16], sizes = [16, 16], strides = [1, 1]} : vector<16x96xf32> to vector<16x16xf32>
    %55 = vector.extract_strided_slice %31 {offsets = [0, 48], sizes = [16, 16], strides = [1, 1]} : vector<16x96xf32> to vector<16x16xf32>
    %56 = vector.extract_strided_slice %31 {offsets = [0, 80], sizes = [16, 16], strides = [1, 1]} : vector<16x96xf32> to vector<16x16xf32>
    %57 = arith.truncf %54 : vector<16x16xf32> to vector<16x16xbf16>
    %58 = arith.truncf %55 : vector<16x16xf32> to vector<16x16xbf16>
    %cst_23 = arith.constant dense<0.000000e+00> : vector<16x16xf32>
    %59 = tpu.matmul %57, %58, %cst_23 {dimension_numbers = #tpu.dot_dimension_numbers<[1], [1], [0], [0], [0, 0, 1, 0], [], []>} : vector<16x16xbf16>, vector<16x16xbf16>, vector<16x16xf32> -> vector<16x16xf32>
    %cst_24 = arith.constant 2.500000e-01 : f32
    %60 = vector.broadcast %cst_24 : f32 to vector<16x16xf32>
    %61 = arith.mulf %59, %60 : vector<16x16xf32>
    %62 = arith.addf %61, %23 : vector<16x16xf32>
    %cst_25 = arith.constant dense<0xFF800000> : vector<16xf32>
    %63 = vector.multi_reduction <maximumf>, %62, %cst_25 [1] : vector<16x16xf32> to vector<16xf32>
    %64 = vector.shape_cast %63 : vector<16xf32> to vector<16x1xf32>
    %65 = vector.broadcast %64 : vector<16x1xf32> to vector<16x16xf32>
    %66 = arith.subf %62, %65 : vector<16x16xf32>
    %67 = math.exp %66 : vector<16x16xf32>
    %cst_26 = arith.constant dense<0.000000e+00> : vector<16xf32>
    %68 = vector.multi_reduction <add>, %67, %cst_26 [1] : vector<16x16xf32> to vector<16xf32>
    %69 = vector.shape_cast %68 : vector<16xf32> to vector<16x1xf32>
    %70 = tpu.reciprocal %69 {approx = true} : vector<16x1xf32> -> vector<16x1xf32>
    %71 = vector.broadcast %70 : vector<16x1xf32> to vector<16x16xf32>
    %72 = arith.mulf %67, %71 : vector<16x16xf32>
    %73 = arith.truncf %72 : vector<16x16xf32> to vector<16x16xbf16>
    %74 = arith.truncf %56 : vector<16x16xf32> to vector<16x16xbf16>
    %cst_27 = arith.constant dense<0.000000e+00> : vector<16x16xf32>
    %75 = tpu.matmul %73, %74, %cst_27 {dimension_numbers = #tpu.dot_dimension_numbers<[1], [0], [0], [1], [0, 0, 1, 1], [], []>} : vector<16x16xbf16>, vector<16x16xbf16>, vector<16x16xf32> -> vector<16x16xf32>
    %76 = tpu.concatenate %53, %75 in 1 : vector<16x16xf32>, vector<16x16xf32> -> vector<16x32xf32>
    %c0_28 = arith.constant 0 : index
    %c0_29 = arith.constant 0 : index
    %c0_30 = arith.constant 0 : index
    %77 = vector.load %arg7[%c0_28, %c0_29, %c0_30] : memref<2x32x32xbf16, #tpu.memory_space<vmem>>, vector<1x32x32xbf16>
    %78 = vector.shape_cast %77 : vector<1x32x32xbf16> to vector<32x32xbf16>
    %79 = arith.truncf %76 : vector<16x32xf32> to vector<16x32xbf16>
    %cst_31 = arith.constant dense<0.000000e+00> : vector<16x32xf32>
    %80 = tpu.matmul %79, %78, %cst_31 {dimension_numbers = #tpu.dot_dimension_numbers<[1], [0], [0], [1], [0, 0, 1, 1], [], []>} : vector<16x32xbf16>, vector<32x32xbf16>, vector<16x32xf32> -> vector<16x32xf32>
    %c0_32 = arith.constant 0 : index
    %c0_33 = arith.constant 0 : index
    %c0_34 = arith.constant 0 : index
    %81 = vector.load %arg8[%c0_32, %c0_33, %c0_34] : memref<2x1x32xf32, #tpu.memory_space<vmem>>, vector<1x1x32xf32>
    %82 = vector.shape_cast %81 : vector<1x1x32xf32> to vector<1x32xf32>
    %83 = vector.broadcast %82 : vector<1x32xf32> to vector<16x32xf32>
    %84 = arith.addf %80, %83 : vector<16x32xf32>
    %85 = arith.addf %22, %84 : vector<16x32xf32>
    %c0_35 = arith.constant 0 : index
    %c0_36 = arith.constant 0 : index
    %c0_37 = arith.constant 0 : index
    %86 = vector.load %arg9[%c0_35, %c0_36, %c0_37] : memref<2x1x32xf32, #tpu.memory_space<vmem>>, vector<1x1x32xf32>
    %87 = vector.shape_cast %86 : vector<1x1x32xf32> to vector<1x32xf32>
    %c0_38 = arith.constant 0 : index
    %c0_39 = arith.constant 0 : index
    %c0_40 = arith.constant 0 : index
    %88 = vector.load %arg10[%c0_38, %c0_39, %c0_40] : memref<2x1x32xf32, #tpu.memory_space<vmem>>, vector<1x1x32xf32>
    %89 = vector.shape_cast %88 : vector<1x1x32xf32> to vector<1x32xf32>
    %cst_41 = arith.constant dense<0.000000e+00> : vector<16xf32>
    %90 = vector.multi_reduction <add>, %85, %cst_41 [1] : vector<16x32xf32> to vector<16xf32>
    %91 = vector.shape_cast %90 : vector<16xf32> to vector<16x1xf32>
    %cst_42 = arith.constant 3.200000e+01 : f32
    %92 = vector.broadcast %cst_42 : f32 to vector<16x1xf32>
    %93 = arith.divf %91, %92 : vector<16x1xf32>
    %94 = vector.broadcast %93 : vector<16x1xf32> to vector<16x32xf32>
    %95 = arith.subf %85, %94 : vector<16x32xf32>
    %96 = arith.mulf %95, %95 : vector<16x32xf32>
    %cst_43 = arith.constant dense<0.000000e+00> : vector<16xf32>
    %97 = vector.multi_reduction <add>, %96, %cst_43 [1] : vector<16x32xf32> to vector<16xf32>
    %98 = vector.shape_cast %97 : vector<16xf32> to vector<16x1xf32>
    %cst_44 = arith.constant 3.200000e+01 : f32
    %99 = vector.broadcast %cst_44 : f32 to vector<16x1xf32>
    %100 = arith.divf %98, %99 : vector<16x1xf32>
    %cst_45 = arith.constant 9.99999996E-13 : f32
    %101 = vector.broadcast %cst_45 : f32 to vector<16x1xf32>
    %102 = arith.addf %100, %101 : vector<16x1xf32>
    %103 = math.rsqrt %102 : vector<16x1xf32>
    %104 = vector.broadcast %103 : vector<16x1xf32> to vector<16x32xf32>
    %105 = arith.mulf %95, %104 : vector<16x32xf32>
    %106 = vector.broadcast %87 : vector<1x32xf32> to vector<16x32xf32>
    %107 = arith.mulf %105, %106 : vector<16x32xf32>
    %108 = vector.broadcast %89 : vector<1x32xf32> to vector<16x32xf32>
    %109 = arith.addf %107, %108 : vector<16x32xf32>
    %c0_46 = arith.constant 0 : index
    %c0_47 = arith.constant 0 : index
    %c0_48 = arith.constant 0 : index
    %110 = vector.load %arg11[%c0_46, %c0_47, %c0_48] : memref<2x32x64xbf16, #tpu.memory_space<vmem>>, vector<1x32x64xbf16>
    %111 = vector.shape_cast %110 : vector<1x32x64xbf16> to vector<32x64xbf16>
    %112 = arith.truncf %109 : vector<16x32xf32> to vector<16x32xbf16>
    %cst_49 = arith.constant dense<0.000000e+00> : vector<16x64xf32>
    %113 = tpu.matmul %112, %111, %cst_49 {dimension_numbers = #tpu.dot_dimension_numbers<[1], [0], [0], [1], [0, 0, 1, 1], [], []>} : vector<16x32xbf16>, vector<32x64xbf16>, vector<16x64xf32> -> vector<16x64xf32>
    %c0_50 = arith.constant 0 : index
    %c0_51 = arith.constant 0 : index
    %c0_52 = arith.constant 0 : index
    %114 = vector.load %arg12[%c0_50, %c0_51, %c0_52] : memref<2x1x64xf32, #tpu.memory_space<vmem>>, vector<1x1x64xf32>
    %115 = vector.shape_cast %114 : vector<1x1x64xf32> to vector<1x64xf32>
    %116 = vector.broadcast %115 : vector<1x64xf32> to vector<16x64xf32>
    %117 = arith.addf %113, %116 : vector<16x64xf32>
    %118 = arith.mulf %117, %117 : vector<16x64xf32>
    %119 = arith.mulf %117, %118 : vector<16x64xf32>
    %cst_53 = arith.constant 4.471500e-02 : f32
    %120 = vector.broadcast %cst_53 : f32 to vector<16x64xf32>
    %121 = arith.mulf %120, %119 : vector<16x64xf32>
    %122 = arith.addf %117, %121 : vector<16x64xf32>
    %cst_54 = arith.constant 0.797884583 : f32
    %123 = vector.broadcast %cst_54 : f32 to vector<16x64xf32>
    %124 = arith.mulf %123, %122 : vector<16x64xf32>
    %125 = math.tanh %124 : vector<16x64xf32>
    %cst_55 = arith.constant 1.000000e+00 : f32
    %126 = vector.broadcast %cst_55 : f32 to vector<16x64xf32>
    %127 = arith.addf %126, %125 : vector<16x64xf32>
    %cst_56 = arith.constant 5.000000e-01 : f32
    %128 = vector.broadcast %cst_56 : f32 to vector<16x64xf32>
    %129 = arith.mulf %128, %127 : vector<16x64xf32>
    %130 = arith.mulf %117, %129 : vector<16x64xf32>
    %c0_57 = arith.constant 0 : index
    %c0_58 = arith.constant 0 : index
    %c0_59 = arith.constant 0 : index
    %131 = vector.load %arg13[%c0_57, %c0_58, %c0_59] : memref<2x64x32xbf16, #tpu.memory_space<vmem>>, vector<1x64x32xbf16>
    %132 = vector.shape_cast %131 : vector<1x64x32xbf16> to vector<64x32xbf16>
    %133 = arith.truncf %130 : vector<16x64xf32> to vector<16x64xbf16>
    %cst_60 = arith.constant dense<0.000000e+00> : vector<16x32xf32>
    %134 = tpu.matmul %133, %132, %cst_60 {dimension_numbers = #tpu.dot_dimension_numbers<[1], [0], [0], [1], [0, 0, 1, 1], [], []>} : vector<16x64xbf16>, vector<64x32xbf16>, vector<16x32xf32> -> vector<16x32xf32>
    %c0_61 = arith.constant 0 : index
    %c0_62 = arith.constant 0 : index
    %c0_63 = arith.constant 0 : index
    %135 = vector.load %arg14[%c0_61, %c0_62, %c0_63] : memref<2x1x32xf32, #tpu.memory_space<vmem>>, vector<1x1x32xf32>
    %136 = vector.shape_cast %135 : vector<1x1x32xf32> to vector<1x32xf32>
    %137 = vector.broadcast %136 : vector<1x32xf32> to vector<16x32xf32>
    %138 = arith.addf %134, %137 : vector<16x32xf32>
    %139 = arith.addf %109, %138 : vector<16x32xf32>
    %c0_64 = arith.constant 0 : index
    %c0_65 = arith.constant 0 : index
    %c0_66 = arith.constant 0 : index
    %140 = vector.load %arg15[%c0_64, %c0_65, %c0_66] : memref<2x1x32xf32, #tpu.memory_space<vmem>>, vector<1x1x32xf32>
    %141 = vector.shape_cast %140 : vector<1x1x32xf32> to vector<1x32xf32>
    %c0_67 = arith.constant 0 : index
    %c0_68 = arith.constant 0 : index
    %c0_69 = arith.constant 0 : index
    %142 = vector.load %arg16[%c0_67, %c0_68, %c0_69] : memref<2x1x32xf32, #tpu.memory_space<vmem>>, vector<1x1x32xf32>
    %143 = vector.shape_cast %142 : vector<1x1x32xf32> to vector<1x32xf32>
    %cst_70 = arith.constant dense<0.000000e+00> : vector<16xf32>
    %144 = vector.multi_reduction <add>, %139, %cst_70 [1] : vector<16x32xf32> to vector<16xf32>
    %145 = vector.shape_cast %144 : vector<16xf32> to vector<16x1xf32>
    %cst_71 = arith.constant 3.200000e+01 : f32
    %146 = vector.broadcast %cst_71 : f32 to vector<16x1xf32>
    %147 = arith.divf %145, %146 : vector<16x1xf32>
    %148 = vector.broadcast %147 : vector<16x1xf32> to vector<16x32xf32>
    %149 = arith.subf %139, %148 : vector<16x32xf32>
    %150 = arith.mulf %149, %149 : vector<16x32xf32>
    %cst_72 = arith.constant dense<0.000000e+00> : vector<16xf32>
    %151 = vector.multi_reduction <add>, %150, %cst_72 [1] : vector<16x32xf32> to vector<16xf32>
    %152 = vector.shape_cast %151 : vector<16xf32> to vector<16x1xf32>
    %cst_73 = arith.constant 3.200000e+01 : f32
    %153 = vector.broadcast %cst_73 : f32 to vector<16x1xf32>
    %154 = arith.divf %152, %153 : vector<16x1xf32>
    %cst_74 = arith.constant 9.99999996E-13 : f32
    %155 = vector.broadcast %cst_74 : f32 to vector<16x1xf32>
    %156 = arith.addf %154, %155 : vector<16x1xf32>
    %157 = math.rsqrt %156 : vector<16x1xf32>
    %158 = vector.broadcast %157 : vector<16x1xf32> to vector<16x32xf32>
    %159 = arith.mulf %149, %158 : vector<16x32xf32>
    %160 = vector.broadcast %141 : vector<1x32xf32> to vector<16x32xf32>
    %161 = arith.mulf %159, %160 : vector<16x32xf32>
    %162 = vector.broadcast %143 : vector<1x32xf32> to vector<16x32xf32>
    %163 = arith.addf %161, %162 : vector<16x32xf32>
    %c1 = arith.constant 1 : index
    %c0_75 = arith.constant 0 : index
    %c0_76 = arith.constant 0 : index
    %164 = vector.load %arg5[%c1, %c0_75, %c0_76] : memref<2x32x96xbf16, #tpu.memory_space<vmem>>, vector<1x32x96xbf16>
    %165 = vector.shape_cast %164 : vector<1x32x96xbf16> to vector<32x96xbf16>
    %166 = arith.truncf %163 : vector<16x32xf32> to vector<16x32xbf16>
    %cst_77 = arith.constant dense<0.000000e+00> : vector<16x96xf32>
    %167 = tpu.matmul %166, %165, %cst_77 {dimension_numbers = #tpu.dot_dimension_numbers<[1], [0], [0], [1], [0, 0, 1, 1], [], []>} : vector<16x32xbf16>, vector<32x96xbf16>, vector<16x96xf32> -> vector<16x96xf32>
    %c1_78 = arith.constant 1 : index
    %c0_79 = arith.constant 0 : index
    %c0_80 = arith.constant 0 : index
    %168 = vector.load %arg6[%c1_78, %c0_79, %c0_80] : memref<2x1x96xf32, #tpu.memory_space<vmem>>, vector<1x1x96xf32>
    %169 = vector.shape_cast %168 : vector<1x1x96xf32> to vector<1x96xf32>
    %170 = vector.broadcast %169 : vector<1x96xf32> to vector<16x96xf32>
    %171 = arith.addf %167, %170 : vector<16x96xf32>
    %172 = vector.extract_strided_slice %171 {offsets = [0, 0], sizes = [16, 16], strides = [1, 1]} : vector<16x96xf32> to vector<16x16xf32>
    %173 = vector.extract_strided_slice %171 {offsets = [0, 32], sizes = [16, 16], strides = [1, 1]} : vector<16x96xf32> to vector<16x16xf32>
    %174 = vector.extract_strided_slice %171 {offsets = [0, 64], sizes = [16, 16], strides = [1, 1]} : vector<16x96xf32> to vector<16x16xf32>
    %175 = arith.truncf %172 : vector<16x16xf32> to vector<16x16xbf16>
    %176 = arith.truncf %173 : vector<16x16xf32> to vector<16x16xbf16>
    %cst_81 = arith.constant dense<0.000000e+00> : vector<16x16xf32>
    %177 = tpu.matmul %175, %176, %cst_81 {dimension_numbers = #tpu.dot_dimension_numbers<[1], [1], [0], [0], [0, 0, 1, 0], [], []>} : vector<16x16xbf16>, vector<16x16xbf16>, vector<16x16xf32> -> vector<16x16xf32>
    %cst_82 = arith.constant 2.500000e-01 : f32
    %178 = vector.broadcast %cst_82 : f32 to vector<16x16xf32>
    %179 = arith.mulf %177, %178 : vector<16x16xf32>
    %180 = arith.addf %179, %23 : vector<16x16xf32>
    %cst_83 = arith.constant dense<0xFF800000> : vector<16xf32>
    %181 = vector.multi_reduction <maximumf>, %180, %cst_83 [1] : vector<16x16xf32> to vector<16xf32>
    %182 = vector.shape_cast %181 : vector<16xf32> to vector<16x1xf32>
    %183 = vector.broadcast %182 : vector<16x1xf32> to vector<16x16xf32>
    %184 = arith.subf %180, %183 : vector<16x16xf32>
    %185 = math.exp %184 : vector<16x16xf32>
    %cst_84 = arith.constant dense<0.000000e+00> : vector<16xf32>
    %186 = vector.multi_reduction <add>, %185, %cst_84 [1] : vector<16x16xf32> to vector<16xf32>
    %187 = vector.shape_cast %186 : vector<16xf32> to vector<16x1xf32>
    %188 = tpu.reciprocal %187 {approx = true} : vector<16x1xf32> -> vector<16x1xf32>
    %189 = vector.broadcast %188 : vector<16x1xf32> to vector<16x16xf32>
    %190 = arith.mulf %185, %189 : vector<16x16xf32>
    %191 = arith.truncf %190 : vector<16x16xf32> to vector<16x16xbf16>
    %192 = arith.truncf %174 : vector<16x16xf32> to vector<16x16xbf16>
    %cst_85 = arith.constant dense<0.000000e+00> : vector<16x16xf32>
    %193 = tpu.matmul %191, %192, %cst_85 {dimension_numbers = #tpu.dot_dimension_numbers<[1], [0], [0], [1], [0, 0, 1, 1], [], []>} : vector<16x16xbf16>, vector<16x16xbf16>, vector<16x16xf32> -> vector<16x16xf32>
    %194 = vector.extract_strided_slice %171 {offsets = [0, 16], sizes = [16, 16], strides = [1, 1]} : vector<16x96xf32> to vector<16x16xf32>
    %195 = vector.extract_strided_slice %171 {offsets = [0, 48], sizes = [16, 16], strides = [1, 1]} : vector<16x96xf32> to vector<16x16xf32>
    %196 = vector.extract_strided_slice %171 {offsets = [0, 80], sizes = [16, 16], strides = [1, 1]} : vector<16x96xf32> to vector<16x16xf32>
    %197 = arith.truncf %194 : vector<16x16xf32> to vector<16x16xbf16>
    %198 = arith.truncf %195 : vector<16x16xf32> to vector<16x16xbf16>
    %cst_86 = arith.constant dense<0.000000e+00> : vector<16x16xf32>
    %199 = tpu.matmul %197, %198, %cst_86 {dimension_numbers = #tpu.dot_dimension_numbers<[1], [1], [0], [0], [0, 0, 1, 0], [], []>} : vector<16x16xbf16>, vector<16x16xbf16>, vector<16x16xf32> -> vector<16x16xf32>
    %cst_87 = arith.constant 2.500000e-01 : f32
    %200 = vector.broadcast %cst_87 : f32 to vector<16x16xf32>
    %201 = arith.mulf %199, %200 : vector<16x16xf32>
    %202 = arith.addf %201, %23 : vector<16x16xf32>
    %cst_88 = arith.constant dense<0xFF800000> : vector<16xf32>
    %203 = vector.multi_reduction <maximumf>, %202, %cst_88 [1] : vector<16x16xf32> to vector<16xf32>
    %204 = vector.shape_cast %203 : vector<16xf32> to vector<16x1xf32>
    %205 = vector.broadcast %204 : vector<16x1xf32> to vector<16x16xf32>
    %206 = arith.subf %202, %205 : vector<16x16xf32>
    %207 = math.exp %206 : vector<16x16xf32>
    %cst_89 = arith.constant dense<0.000000e+00> : vector<16xf32>
    %208 = vector.multi_reduction <add>, %207, %cst_89 [1] : vector<16x16xf32> to vector<16xf32>
    %209 = vector.shape_cast %208 : vector<16xf32> to vector<16x1xf32>
    %210 = tpu.reciprocal %209 {approx = true} : vector<16x1xf32> -> vector<16x1xf32>
    %211 = vector.broadcast %210 : vector<16x1xf32> to vector<16x16xf32>
    %212 = arith.mulf %207, %211 : vector<16x16xf32>
    %213 = arith.truncf %212 : vector<16x16xf32> to vector<16x16xbf16>
    %214 = arith.truncf %196 : vector<16x16xf32> to vector<16x16xbf16>
    %cst_90 = arith.constant dense<0.000000e+00> : vector<16x16xf32>
    %215 = tpu.matmul %213, %214, %cst_90 {dimension_numbers = #tpu.dot_dimension_numbers<[1], [0], [0], [1], [0, 0, 1, 1], [], []>} : vector<16x16xbf16>, vector<16x16xbf16>, vector<16x16xf32> -> vector<16x16xf32>
    %216 = tpu.concatenate %193, %215 in 1 : vector<16x16xf32>, vector<16x16xf32> -> vector<16x32xf32>
    %c1_91 = arith.constant 1 : index
    %c0_92 = arith.constant 0 : index
    %c0_93 = arith.constant 0 : index
    %217 = vector.load %arg7[%c1_91, %c0_92, %c0_93] : memref<2x32x32xbf16, #tpu.memory_space<vmem>>, vector<1x32x32xbf16>
    %218 = vector.shape_cast %217 : vector<1x32x32xbf16> to vector<32x32xbf16>
    %219 = arith.truncf %216 : vector<16x32xf32> to vector<16x32xbf16>
    %cst_94 = arith.constant dense<0.000000e+00> : vector<16x32xf32>
    %220 = tpu.matmul %219, %218, %cst_94 {dimension_numbers = #tpu.dot_dimension_numbers<[1], [0], [0], [1], [0, 0, 1, 1], [], []>} : vector<16x32xbf16>, vector<32x32xbf16>, vector<16x32xf32> -> vector<16x32xf32>
    %c1_95 = arith.constant 1 : index
    %c0_96 = arith.constant 0 : index
    %c0_97 = arith.constant 0 : index
    %221 = vector.load %arg8[%c1_95, %c0_96, %c0_97] : memref<2x1x32xf32, #tpu.memory_space<vmem>>, vector<1x1x32xf32>
    %222 = vector.shape_cast %221 : vector<1x1x32xf32> to vector<1x32xf32>
    %223 = vector.broadcast %222 : vector<1x32xf32> to vector<16x32xf32>
    %224 = arith.addf %220, %223 : vector<16x32xf32>
    %225 = arith.addf %163, %224 : vector<16x32xf32>
    %c1_98 = arith.constant 1 : index
    %c0_99 = arith.constant 0 : index
    %c0_100 = arith.constant 0 : index
    %226 = vector.load %arg9[%c1_98, %c0_99, %c0_100] : memref<2x1x32xf32, #tpu.memory_space<vmem>>, vector<1x1x32xf32>
    %227 = vector.shape_cast %226 : vector<1x1x32xf32> to vector<1x32xf32>
    %c1_101 = arith.constant 1 : index
    %c0_102 = arith.constant 0 : index
    %c0_103 = arith.constant 0 : index
    %228 = vector.load %arg10[%c1_101, %c0_102, %c0_103] : memref<2x1x32xf32, #tpu.memory_space<vmem>>, vector<1x1x32xf32>
    %229 = vector.shape_cast %228 : vector<1x1x32xf32> to vector<1x32xf32>
    %cst_104 = arith.constant dense<0.000000e+00> : vector<16xf32>
    %230 = vector.multi_reduction <add>, %225, %cst_104 [1] : vector<16x32xf32> to vector<16xf32>
    %231 = vector.shape_cast %230 : vector<16xf32> to vector<16x1xf32>
    %cst_105 = arith.constant 3.200000e+01 : f32
    %232 = vector.broadcast %cst_105 : f32 to vector<16x1xf32>
    %233 = arith.divf %231, %232 : vector<16x1xf32>
    %234 = vector.broadcast %233 : vector<16x1xf32> to vector<16x32xf32>
    %235 = arith.subf %225, %234 : vector<16x32xf32>
    %236 = arith.mulf %235, %235 : vector<16x32xf32>
    %cst_106 = arith.constant dense<0.000000e+00> : vector<16xf32>
    %237 = vector.multi_reduction <add>, %236, %cst_106 [1] : vector<16x32xf32> to vector<16xf32>
    %238 = vector.shape_cast %237 : vector<16xf32> to vector<16x1xf32>
    %cst_107 = arith.constant 3.200000e+01 : f32
    %239 = vector.broadcast %cst_107 : f32 to vector<16x1xf32>
    %240 = arith.divf %238, %239 : vector<16x1xf32>
    %cst_108 = arith.constant 9.99999996E-13 : f32
    %241 = vector.broadcast %cst_108 : f32 to vector<16x1xf32>
    %242 = arith.addf %240, %241 : vector<16x1xf32>
    %243 = math.rsqrt %242 : vector<16x1xf32>
    %244 = vector.broadcast %243 : vector<16x1xf32> to vector<16x32xf32>
    %245 = arith.mulf %235, %244 : vector<16x32xf32>
    %246 = vector.broadcast %227 : vector<1x32xf32> to vector<16x32xf32>
    %247 = arith.mulf %245, %246 : vector<16x32xf32>
    %248 = vector.broadcast %229 : vector<1x32xf32> to vector<16x32xf32>
    %249 = arith.addf %247, %248 : vector<16x32xf32>
    %c1_109 = arith.constant 1 : index
    %c0_110 = arith.constant 0 : index
    %c0_111 = arith.constant 0 : index
    %250 = vector.load %arg11[%c1_109, %c0_110, %c0_111] : memref<2x32x64xbf16, #tpu.memory_space<vmem>>, vector<1x32x64xbf16>
    %251 = vector.shape_cast %250 : vector<1x32x64xbf16> to vector<32x64xbf16>
    %252 = arith.truncf %249 : vector<16x32xf32> to vector<16x32xbf16>
    %cst_112 = arith.constant dense<0.000000e+00> : vector<16x64xf32>
    %253 = tpu.matmul %252, %251, %cst_112 {dimension_numbers = #tpu.dot_dimension_numbers<[1], [0], [0], [1], [0, 0, 1, 1], [], []>} : vector<16x32xbf16>, vector<32x64xbf16>, vector<16x64xf32> -> vector<16x64xf32>
    %c1_113 = arith.constant 1 : index
    %c0_114 = arith.constant 0 : index
    %c0_115 = arith.constant 0 : index
    %254 = vector.load %arg12[%c1_113, %c0_114, %c0_115] : memref<2x1x64xf32, #tpu.memory_space<vmem>>, vector<1x1x64xf32>
    %255 = vector.shape_cast %254 : vector<1x1x64xf32> to vector<1x64xf32>
    %256 = vector.broadcast %255 : vector<1x64xf32> to vector<16x64xf32>
    %257 = arith.addf %253, %256 : vector<16x64xf32>
    %258 = arith.mulf %257, %257 : vector<16x64xf32>
    %259 = arith.mulf %257, %258 : vector<16x64xf32>
    %cst_116 = arith.constant 4.471500e-02 : f32
    %260 = vector.broadcast %cst_116 : f32 to vector<16x64xf32>
    %261 = arith.mulf %260, %259 : vector<16x64xf32>
    %262 = arith.addf %257, %261 : vector<16x64xf32>
    %cst_117 = arith.constant 0.797884583 : f32
    %263 = vector.broadcast %cst_117 : f32 to vector<16x64xf32>
    %264 = arith.mulf %263, %262 : vector<16x64xf32>
    %265 = math.tanh %264 : vector<16x64xf32>
    %cst_118 = arith.constant 1.000000e+00 : f32
    %266 = vector.broadcast %cst_118 : f32 to vector<16x64xf32>
    %267 = arith.addf %266, %265 : vector<16x64xf32>
    %cst_119 = arith.constant 5.000000e-01 : f32
    %268 = vector.broadcast %cst_119 : f32 to vector<16x64xf32>
    %269 = arith.mulf %268, %267 : vector<16x64xf32>
    %270 = arith.mulf %257, %269 : vector<16x64xf32>
    %c1_120 = arith.constant 1 : index
    %c0_121 = arith.constant 0 : index
    %c0_122 = arith.constant 0 : index
    %271 = vector.load %arg13[%c1_120, %c0_121, %c0_122] : memref<2x64x32xbf16, #tpu.memory_space<vmem>>, vector<1x64x32xbf16>
    %272 = vector.shape_cast %271 : vector<1x64x32xbf16> to vector<64x32xbf16>
    %273 = arith.truncf %270 : vector<16x64xf32> to vector<16x64xbf16>
    %cst_123 = arith.constant dense<0.000000e+00> : vector<16x32xf32>
    %274 = tpu.matmul %273, %272, %cst_123 {dimension_numbers = #tpu.dot_dimension_numbers<[1], [0], [0], [1], [0, 0, 1, 1], [], []>} : vector<16x64xbf16>, vector<64x32xbf16>, vector<16x32xf32> -> vector<16x32xf32>
    %c1_124 = arith.constant 1 : index
    %c0_125 = arith.constant 0 : index
    %c0_126 = arith.constant 0 : index
    %275 = vector.load %arg14[%c1_124, %c0_125, %c0_126] : memref<2x1x32xf32, #tpu.memory_space<vmem>>, vector<1x1x32xf32>
    %276 = vector.shape_cast %275 : vector<1x1x32xf32> to vector<1x32xf32>
    %277 = vector.broadcast %276 : vector<1x32xf32> to vector<16x32xf32>
    %278 = arith.addf %274, %277 : vector<16x32xf32>
    %279 = arith.addf %249, %278 : vector<16x32xf32>
    %c1_127 = arith.constant 1 : index
    %c0_128 = arith.constant 0 : index
    %c0_129 = arith.constant 0 : index
    %280 = vector.load %arg15[%c1_127, %c0_128, %c0_129] : memref<2x1x32xf32, #tpu.memory_space<vmem>>, vector<1x1x32xf32>
    %281 = vector.shape_cast %280 : vector<1x1x32xf32> to vector<1x32xf32>
    %c1_130 = arith.constant 1 : index
    %c0_131 = arith.constant 0 : index
    %c0_132 = arith.constant 0 : index
    %282 = vector.load %arg16[%c1_130, %c0_131, %c0_132] : memref<2x1x32xf32, #tpu.memory_space<vmem>>, vector<1x1x32xf32>
    %283 = vector.shape_cast %282 : vector<1x1x32xf32> to vector<1x32xf32>
    %cst_133 = arith.constant dense<0.000000e+00> : vector<16xf32>
    %284 = vector.multi_reduction <add>, %279, %cst_133 [1] : vector<16x32xf32> to vector<16xf32>
    %285 = vector.shape_cast %284 : vector<16xf32> to vector<16x1xf32>
    %cst_134 = arith.constant 3.200000e+01 : f32
    %286 = vector.broadcast %cst_134 : f32 to vector<16x1xf32>
    %287 = arith.divf %285, %286 : vector<16x1xf32>
    %288 = vector.broadcast %287 : vector<16x1xf32> to vector<16x32xf32>
    %289 = arith.subf %279, %288 : vector<16x32xf32>
    %290 = arith.mulf %289, %289 : vector<16x32xf32>
    %cst_135 = arith.constant dense<0.000000e+00> : vector<16xf32>
    %291 = vector.multi_reduction <add>, %290, %cst_135 [1] : vector<16x32xf32> to vector<16xf32>
    %292 = vector.shape_cast %291 : vector<16xf32> to vector<16x1xf32>
    %cst_136 = arith.constant 3.200000e+01 : f32
    %293 = vector.broadcast %cst_136 : f32 to vector<16x1xf32>
    %294 = arith.divf %292, %293 : vector<16x1xf32>
    %cst_137 = arith.constant 9.99999996E-13 : f32
    %295 = vector.broadcast %cst_137 : f32 to vector<16x1xf32>
    %296 = arith.addf %294, %295 : vector<16x1xf32>
    %297 = math.rsqrt %296 : vector<16x1xf32>
    %298 = vector.broadcast %297 : vector<16x1xf32> to vector<16x32xf32>
    %299 = arith.mulf %289, %298 : vector<16x32xf32>
    %300 = vector.broadcast %281 : vector<1x32xf32> to vector<16x32xf32>
    %301 = arith.mulf %299, %300 : vector<16x32xf32>
    %302 = vector.broadcast %283 : vector<1x32xf32> to vector<16x32xf32>
    %303 = arith.addf %301, %302 : vector<16x32xf32>
    %304 = vector.extract_strided_slice %303 {offsets = [0, 0], sizes = [1, 32], strides = [1, 1]} : vector<16x32xf32> to vector<1x32xf32>
    %305 = vector.extract_strided_slice %303 {offsets = [8, 0], sizes = [1, 32], strides = [1, 1]} : vector<16x32xf32> to vector<1x32xf32>
    %306 = tpu.concatenate %304, %305 in 0 : vector<1x32xf32>, vector<1x32xf32> -> vector<2x32xf32>
    %c0_138 = arith.constant 0 : index
    %c0_139 = arith.constant 0 : index
    %307 = vector.load %arg17[%c0_138, %c0_139] : memref<32x32xbf16, #tpu.memory_space<vmem>>, vector<32x32xbf16>
    %308 = arith.truncf %306 : vector<2x32xf32> to vector<2x32xbf16>
    %cst_140 = arith.constant dense<0.000000e+00> : vector<2x32xf32>
    %309 = tpu.matmul %308, %307, %cst_140 {dimension_numbers = #tpu.dot_dimension_numbers<[1], [0], [0], [1], [0, 0, 1, 1], [], []>} : vector<2x32xbf16>, vector<32x32xbf16>, vector<2x32xf32> -> vector<2x32xf32>
    %c0_141 = arith.constant 0 : index
    %c0_142 = arith.constant 0 : index
    %310 = vector.load %arg18[%c0_141, %c0_142] : memref<1x32xf32, #tpu.memory_space<vmem>>, vector<1x32xf32>
    %311 = vector.broadcast %310 : vector<1x32xf32> to vector<2x32xf32>
    %312 = arith.addf %309, %311 : vector<2x32xf32>
    %313 = math.tanh %312 : vector<2x32xf32>
    %c0_143 = arith.constant 0 : index
    %c0_144 = arith.constant 0 : index
    %314 = vector.load %arg19[%c0_143, %c0_144] : memref<32x256xbf16, #tpu.memory_space<vmem>>, vector<32x256xbf16>
    %315 = arith.truncf %313 : vector<2x32xf32> to vector<2x32xbf16>
    %cst_145 = arith.constant dense<0.000000e+00> : vector<2x256xf32>
    %316 = tpu.matmul %315, %314, %cst_145 {dimension_numbers = #tpu.dot_dimension_numbers<[1], [0], [0], [1], [0, 0, 1, 1], [], []>} : vector<2x32xbf16>, vector<32x256xbf16>, vector<2x256xf32> -> vector<2x256xf32>
    %c0_146 = arith.constant 0 : index
    %c0_147 = arith.constant 0 : index
    %317 = vector.load %arg20[%c0_146, %c0_147] : memref<1x256xf32, #tpu.memory_space<vmem>>, vector<1x256xf32>
    %318 = vector.broadcast %317 : vector<1x256xf32> to vector<2x256xf32>
    %319 = arith.addf %316, %318 : vector<2x256xf32>
    %cst_148 = arith.constant 0.000000e+00 : f32
    %320 = vector.broadcast %cst_148 : f32 to vector<2x256xf32>
    %321 = arith.maximumf %319, %320 : vector<2x256xf32>
    %c0_149 = arith.constant 0 : index
    %c0_150 = arith.constant 0 : index
    %322 = vector.load %arg21[%c0_149, %c0_150] : memref<256x3xbf16, #tpu.memory_space<vmem>>, vector<256x3xbf16>
    %323 = arith.truncf %321 : vector<2x256xf32> to vector<2x256xbf16>
    %cst_151 = arith.constant dense<0.000000e+00> : vector<2x3xf32>
    %324 = tpu.matmul %323, %322, %cst_151 {dimension_numbers = #tpu.dot_dimension_numbers<[1], [0], [0], [1], [0, 0, 1, 1], [], []>} : vector<2x256xbf16>, vector<256x3xbf16>, vector<2x3xf32> -> vector<2x3xf32>
    %c0_152 = arith.constant 0 : index
    %c0_153 = arith.constant 0 : index
    %325 = vector.load %arg22[%c0_152, %c0_153] : memref<1x3xf32, #tpu.memory_space<vmem>>, vector<1x3xf32>
    %326 = vector.broadcast %325 : vector<1x3xf32> to vector<2x3xf32>
    %327 = arith.addf %324, %326 : vector<2x3xf32>
    %c0_154 = arith.constant 0 : index
    %c0_155 = arith.constant 0 : index
    %328 = vector.load %arg23[%c0_154, %c0_155] : memref<2x3xf32, #tpu.memory_space<vmem>>, vector<2x3xf32>
    tpu.vector_store %arg23[%c0_154, %c0_155], %327 {strides = array<i32>} : memref<2x3xf32, #tpu.memory_space<vmem>>, vector<2x3xf32>,
    return
  }
  func.func @transform_0(%arg0: i32) -> (i32, i32) {
    %c0_i32 = arith.constant 0 : i32
    %c0_i32_0 = arith.constant 0 : i32
    %c0_i32_1 = arith.constant 0 : i32
    return %c0_i32, %c0_i32_0 : i32, i32
  }
  func.func @transform_1(%arg0: i32) -> (i32, i32) {
    %c0_i32 = arith.constant 0 : i32
    %c0_i32_0 = arith.constant 0 : i32
    %c0_i32_1 = arith.constant 0 : i32
    return %c0_i32, %c0_i32_0 : i32, i32
  }
  func.func @transform_2(%arg0: i32) -> (i32, i32) {
    %c0_i32 = arith.constant 0 : i32
    %c0_i32_0 = arith.constant 0 : i32
    %c0_i32_1 = arith.constant 0 : i32
    return %c0_i32, %c0_i32_0 : i32, i32
  }
  func.func @transform_3(%arg0: i32) -> (i32, i32) {
    %c0_i32 = arith.constant 0 : i32
    %c0_i32_0 = arith.constant 0 : i32
    %c0_i32_1 = arith.constant 0 : i32
    return %c0_i32, %c0_i32_0 : i32, i32
  }
  func.func @transform_4(%arg0: i32) -> (i32, i32, i32) {
    %c0_i32 = arith.constant 0 : i32
    %c0_i32_0 = arith.constant 0 : i32
    %c0_i32_1 = arith.constant 0 : i32
    %c0_i32_2 = arith.constant 0 : i32
    return %c0_i32, %c0_i32_0, %c0_i32_1 : i32, i32, i32
  }
  func.func @transform_5(%arg0: i32) -> (i32, i32, i32) {
    %c0_i32 = arith.constant 0 : i32
    %c0_i32_0 = arith.constant 0 : i32
    %c0_i32_1 = arith.constant 0 : i32
    %c0_i32_2 = arith.constant 0 : i32
    return %c0_i32, %c0_i32_0, %c0_i32_1 : i32, i32, i32
  }
  func.func @transform_6(%arg0: i32) -> (i32, i32, i32) {
    %c0_i32 = arith.constant 0 : i32
    %c0_i32_0 = arith.constant 0 : i32
    %c0_i32_1 = arith.constant 0 : i32
    %c0_i32_2 = arith.constant 0 : i32
    return %c0_i32, %c0_i32_0, %c0_i32_1 : i32, i32, i32
  }
  func.func @transform_7(%arg0: i32) -> (i32, i32, i32) {
    %c0_i32 = arith.constant 0 : i32
    %c0_i32_0 = arith.constant 0 : i32
    %c0_i32_1 = arith.constant 0 : i32
    %c0_i32_2 = arith.constant 0 : i32
    return %c0_i32, %c0_i32_0, %c0_i32_1 : i32, i32, i32
  }
  func.func @transform_8(%arg0: i32) -> (i32, i32, i32) {
    %c0_i32 = arith.constant 0 : i32
    %c0_i32_0 = arith.constant 0 : i32
    %c0_i32_1 = arith.constant 0 : i32
    %c0_i32_2 = arith.constant 0 : i32
    return %c0_i32, %c0_i32_0, %c0_i32_1 : i32, i32, i32
  }
  func.func @transform_9(%arg0: i32) -> (i32, i32, i32) {
    %c0_i32 = arith.constant 0 : i32
    %c0_i32_0 = arith.constant 0 : i32
    %c0_i32_1 = arith.constant 0 : i32
    %c0_i32_2 = arith.constant 0 : i32
    return %c0_i32, %c0_i32_0, %c0_i32_1 : i32, i32, i32
  }
  func.func @transform_10(%arg0: i32) -> (i32, i32, i32) {
    %c0_i32 = arith.constant 0 : i32
    %c0_i32_0 = arith.constant 0 : i32
    %c0_i32_1 = arith.constant 0 : i32
    %c0_i32_2 = arith.constant 0 : i32
    return %c0_i32, %c0_i32_0, %c0_i32_1 : i32, i32, i32
  }
  func.func @transform_11(%arg0: i32) -> (i32, i32, i32) {
    %c0_i32 = arith.constant 0 : i32
    %c0_i32_0 = arith.constant 0 : i32
    %c0_i32_1 = arith.constant 0 : i32
    %c0_i32_2 = arith.constant 0 : i32
    return %c0_i32, %c0_i32_0, %c0_i32_1 : i32, i32, i32
  }
  func.func @transform_12(%arg0: i32) -> (i32, i32, i32) {
    %c0_i32 = arith.constant 0 : i32
    %c0_i32_0 = arith.constant 0 : i32
    %c0_i32_1 = arith.constant 0 : i32
    %c0_i32_2 = arith.constant 0 : i32
    return %c0_i32, %c0_i32_0, %c0_i32_1 : i32, i32, i32
  }
  func.func @transform_13(%arg0: i32) -> (i32, i32, i32) {
    %c0_i32 = arith.constant 0 : i32
    %c0_i32_0 = arith.constant 0 : i32
    %c0_i32_1 = arith.constant 0 : i32
    %c0_i32_2 = arith.constant 0 : i32
    return %c0_i32, %c0_i32_0, %c0_i32_1 : i32, i32, i32
  }
  func.func @transform_14(%arg0: i32) -> (i32, i32, i32) {
    %c0_i32 = arith.constant 0 : i32
    %c0_i32_0 = arith.constant 0 : i32
    %c0_i32_1 = arith.constant 0 : i32
    %c0_i32_2 = arith.constant 0 : i32
    return %c0_i32, %c0_i32_0, %c0_i32_1 : i32, i32, i32
  }
  func.func @transform_15(%arg0: i32) -> (i32, i32, i32) {
    %c0_i32 = arith.constant 0 : i32
    %c0_i32_0 = arith.constant 0 : i32
    %c0_i32_1 = arith.constant 0 : i32
    %c0_i32_2 = arith.constant 0 : i32
    return %c0_i32, %c0_i32_0, %c0_i32_1 : i32, i32, i32
  }
  func.func @transform_16(%arg0: i32) -> (i32, i32) {
    %c0_i32 = arith.constant 0 : i32
    %c0_i32_0 = arith.constant 0 : i32
    %c0_i32_1 = arith.constant 0 : i32
    return %c0_i32, %c0_i32_0 : i32, i32
  }
  func.func @transform_17(%arg0: i32) -> (i32, i32) {
    %c0_i32 = arith.constant 0 : i32
    %c0_i32_0 = arith.constant 0 : i32
    %c0_i32_1 = arith.constant 0 : i32
    return %c0_i32, %c0_i32_0 : i32, i32
  }
  func.func @transform_18(%arg0: i32) -> (i32, i32) {
    %c0_i32 = arith.constant 0 : i32
    %c0_i32_0 = arith.constant 0 : i32
    %c0_i32_1 = arith.constant 0 : i32
    return %c0_i32, %c0_i32_0 : i32, i32
  }
  func.func @transform_19(%arg0: i32) -> (i32, i32) {
    %c0_i32 = arith.constant 0 : i32
    %c0_i32_0 = arith.constant 0 : i32
    %c0_i32_1 = arith.constant 0 : i32
    return %c0_i32, %c0_i32_0 : i32, i32
  }
  func.func @transform_20(%arg0: i32) -> (i32, i32) {
    %c0_i32 = arith.constant 0 : i32
    %c0_i32_0 = arith.constant 0 : i32
    %c0_i32_1 = arith.constant 0 : i32
    return %c0_i32, %c0_i32_0 : i32, i32
  }
  func.func @transform_21(%arg0: i32) -> (i32, i32) {
    %c0_i32 = arith.constant 0 : i32
    %c0_i32_0 = arith.constant 0 : i32
    %c0_i32_1 = arith.constant 0 : i32
    return %c0_i32, %c0_i32_0 : i32, i32
  }
  func.func @transform_22(%arg0: i32) -> (i32, i32) {
    %c0_i32 = arith.constant 0 : i32
    %c0_i32_0 = arith.constant 0 : i32
    %c0_i32_1 = arith.constant 0 : i32
    return %c0_i32, %c0_i32_0 : i32, i32
  }
}

</mosaic_0001>

<llo_original>
// kernel: bert_classifier_forward.1
$region0: #{bert_classifier_forward.1}
  #allocation0 [shape = 'u32[]', space=smem, size = 0x4, offset = 0x4, fixed_abs, tag = 'smem constant byte address 0x4 - core index']
  #allocation1 [shape = 'u32[144,128]{1,0:T(1,128)}', space=vmem, size = 0x12000, scoped, tag = 'internal scratch']
  %s0 = inlined_call_operand.vmem [shape: f32[16,32], index: 0, kind: input, shape index: {}]
  %s1 = inlined_call_operand.vmem [shape: f32[16,16], index: 1, kind: input, shape index: {}]
  %s2 = inlined_call_operand.vmem [shape: f32[1,32], index: 2, kind: input, shape index: {}]
  %s3 = inlined_call_operand.vmem [shape: f32[1,32], index: 3, kind: input, shape index: {}]
  %s4 = inlined_call_operand.vmem [shape: bf16[2,32,96], index: 4, kind: input, shape index: {}]
  %s5 = inlined_call_operand.vmem [shape: f32[2,1,96], index: 5, kind: input, shape index: {}]
  %s6 = inlined_call_operand.vmem [shape: bf16[2,32,32], index: 6, kind: input, shape index: {}]
  %s7 = inlined_call_operand.vmem [shape: f32[2,1,32], index: 7, kind: input, shape index: {}]
  %s8 = inlined_call_operand.vmem [shape: f32[2,1,32], index: 8, kind: input, shape index: {}]
  %s9 = inlined_call_operand.vmem [shape: f32[2,1,32], index: 9, kind: input, shape index: {}]
  %s10 = inlined_call_operand.vmem [shape: bf16[2,32,64], index: 10, kind: input, shape index: {}]
  %s11 = inlined_call_operand.vmem [shape: f32[2,1,64], index: 11, kind: input, shape index: {}]
  %s12 = inlined_call_operand.vmem [shape: bf16[2,64,32], index: 12, kind: input, shape index: {}]
  %s13 = inlined_call_operand.vmem [shape: f32[2,1,32], index: 13, kind: input, shape index: {}]
  %s14 = inlined_call_operand.vmem [shape: f32[2,1,32], index: 14, kind: input, shape index: {}]
  %s15 = inlined_call_operand.vmem [shape: f32[2,1,32], index: 15, kind: input, shape index: {}]
  %s16 = inlined_call_operand.vmem [shape: bf16[32,32], index: 16, kind: input, shape index: {}]
  %s17 = inlined_call_operand.vmem [shape: f32[1,32], index: 17, kind: input, shape index: {}]
  %s18 = inlined_call_operand.vmem [shape: bf16[32,256], index: 18, kind: input, shape index: {}]
  %s19 = inlined_call_operand.vmem [shape: f32[1,256], index: 19, kind: input, shape index: {}]
  %s20 = inlined_call_operand.vmem [shape: bf16[256,3], index: 20, kind: input, shape index: {}]
  %s21 = inlined_call_operand.vmem [shape: f32[1,3], index: 21, kind: input, shape index: {}]
  %s22 = inlined_call_operand.hbm [shape: f32[2,3], index: 22, kind: output, shape index: {}]
  %s23 = sld [smem:[#allocation0]]
  $region98: #{bert_classifier_forward.1} parent=0
    _
  %s25 = ssub.s32 1, %s23
  %s26 = scalar_select 0, %s25, %s23
  $region1: #{bert_classifier_forward.1} parent=0
    #allocation2 [shape = 'u8[1024]{0}', space=vmem, size = 0x400, scoped, tag = 'output window, operand 0, single buffered']
    #allocation3 [shape = 's32[1]{0}', space=sflag, size = 0x4, scoped, tag = 'scoped memory for bert_classifier_forward.1']
    %27 = vsyncpa [#allocation3], 0
    // Predicated region
    $region2: #{bert_classifier_forward.1} parent=1 // pred_check
      _
    $region3: #{bert_classifier_forward.1} parent=1 // pred_check_branch
      %29 = sbr.rel (0) target = $region5
    $region4: #{bert_classifier_forward.1} parent=1 // pred_region
      _
    $region5: #{bert_classifier_forward.1} parent=1 // pred_fallthru
      _
    // Predicated region
    $region6: #{bert_classifier_forward.1} parent=1 // pred_check
      _
    $region7: #{bert_classifier_forward.1} parent=1 // pred_check_branch
      %31 = sbr.rel (0) target = $region9
    $region8: #{bert_classifier_forward.1} parent=1 // pred_region
      _
    $region9: #{bert_classifier_forward.1} parent=1 // pred_fallthru
      _
    // Predicated region
    $region10: #{bert_classifier_forward.1} parent=1 // pred_check
      _
    $region11: #{bert_classifier_forward.1} parent=1 // pred_check_branch
      %33 = sbr.rel (0) target = $region13
    $region12: #{bert_classifier_forward.1} parent=1 // pred_region
      _
    $region13: #{bert_classifier_forward.1} parent=1 // pred_fallthru
      _
    // Predicated region
    $region14: #{bert_classifier_forward.1} parent=1 // pred_check
      _
    $region15: #{bert_classifier_forward.1} parent=1 // pred_check_branch
      %35 = sbr.rel (0) target = $region17
    $region16: #{bert_classifier_forward.1} parent=1 // pred_region
      _
    $region17: #{bert_classifier_forward.1} parent=1 // pred_fallthru
      _
    // Predicated region
    $region18: #{bert_classifier_forward.1} parent=1 // pred_check
      _
    $region19: #{bert_classifier_forward.1} parent=1 // pred_check_branch
      %37 = sbr.rel (0) target = $region21
    $region20: #{bert_classifier_forward.1} parent=1 // pred_region
      _
    $region21: #{bert_classifier_forward.1} parent=1 // pred_fallthru
      _
    // Predicated region
    $region22: #{bert_classifier_forward.1} parent=1 // pred_check
      _
    $region23: #{bert_classifier_forward.1} parent=1 // pred_check_branch
      %39 = sbr.rel (0) target = $region25
    $region24: #{bert_classifier_forward.1} parent=1 // pred_region
      _
    $region25: #{bert_classifier_forward.1} parent=1 // pred_fallthru
      _
    // Predicated region
    $region26: #{bert_classifier_forward.1} parent=1 // pred_check
      _
    $region27: #{bert_classifier_forward.1} parent=1 // pred_check_branch
      %41 = sbr.rel (0) target = $region29
    $region28: #{bert_classifier_forward.1} parent=1 // pred_region
      _
    $region29: #{bert_classifier_forward.1} parent=1 // pred_fallthru
      _
    // Predicated region
    $region30: #{bert_classifier_forward.1} parent=1 // pred_check
      _
    $region31: #{bert_classifier_forward.1} parent=1 // pred_check_branch
      %43 = sbr.rel (0) target = $region33
    $region32: #{bert_classifier_forward.1} parent=1 // pred_region
      _
    $region33: #{bert_classifier_forward.1} parent=1 // pred_fallthru
      _
    // Predicated region
    $region34: #{bert_classifier_forward.1} parent=1 // pred_check
      _
    $region35: #{bert_classifier_forward.1} parent=1 // pred_check_branch
      %45 = sbr.rel (0) target = $region37
    $region36: #{bert_classifier_forward.1} parent=1 // pred_region
      _
    $region37: #{bert_classifier_forward.1} parent=1 // pred_fallthru
      _
    // Predicated region
    $region38: #{bert_classifier_forward.1} parent=1 // pred_check
      _
    $region39: #{bert_classifier_forward.1} parent=1 // pred_check_branch
      %47 = sbr.rel (0) target = $region41
    $region40: #{bert_classifier_forward.1} parent=1 // pred_region
      _
    $region41: #{bert_classifier_forward.1} parent=1 // pred_fallthru
      _
    // Predicated region
    $region42: #{bert_classifier_forward.1} parent=1 // pred_check
      _
    $region43: #{bert_classifier_forward.1} parent=1 // pred_check_branch
      %49 = sbr.rel (0) target = $region45
    $region44: #{bert_classifier_forward.1} parent=1 // pred_region
      _
    $region45: #{bert_classifier_forward.1} parent=1 // pred_fallthru
      _
    // Predicated region
    $region46: #{bert_classifier_forward.1} parent=1 // pred_check
      _
    $region47: #{bert_classifier_forward.1} parent=1 // pred_check_branch
      %51 = sbr.rel (0) target = $region49
    $region48: #{bert_classifier_forward.1} parent=1 // pred_region
      _
    $region49: #{bert_classifier_forward.1} parent=1 // pred_fallthru
      _
    // Predicated region
    $region50: #{bert_classifier_forward.1} parent=1 // pred_check
      _
    $region51: #{bert_classifier_forward.1} parent=1 // pred_check_branch
      %53 = sbr.rel (0) target = $region53
    $region52: #{bert_classifier_forward.1} parent=1 // pred_region
      _
    $region53: #{bert_classifier_forward.1} parent=1 // pred_fallthru
      _
    // Predicated region
    $region54: #{bert_classifier_forward.1} parent=1 // pred_check
      _
    $region55: #{bert_classifier_forward.1} parent=1 // pred_check_branch
      %55 = sbr.rel (0) target = $region57
    $region56: #{bert_classifier_forward.1} parent=1 // pred_region
      _
    $region57: #{bert_classifier_forward.1} parent=1 // pred_fallthru
      _
    // Predicated region
    $region58: #{bert_classifier_forward.1} parent=1 // pred_check
      _
    $region59: #{bert_classifier_forward.1} parent=1 // pred_check_branch
      %57 = sbr.rel (0) target = $region61
    $region60: #{bert_classifier_forward.1} parent=1 // pred_region
      _
    $region61: #{bert_classifier_forward.1} parent=1 // pred_fallthru
      _
    // Predicated region
    $region62: #{bert_classifier_forward.1} parent=1 // pred_check
      _
    $region63: #{bert_classifier_forward.1} parent=1 // pred_check_branch
      %59 = sbr.rel (0) target = $region65
    $region64: #{bert_classifier_forward.1} parent=1 // pred_region
      _
    $region65: #{bert_classifier_forward.1} parent=1 // pred_fallthru
      _
    // Predicated region
    $region66: #{bert_classifier_forward.1} parent=1 // pred_check
      _
    $region67: #{bert_classifier_forward.1} parent=1 // pred_check_branch
      %61 = sbr.rel (0) target = $region69
    $region68: #{bert_classifier_forward.1} parent=1 // pred_region
      _
    $region69: #{bert_classifier_forward.1} parent=1 // pred_fallthru
      _
    // Predicated region
    $region70: #{bert_classifier_forward.1} parent=1 // pred_check
      _
    $region71: #{bert_classifier_forward.1} parent=1 // pred_check_branch
      %63 = sbr.rel (0) target = $region73
    $region72: #{bert_classifier_forward.1} parent=1 // pred_region
      _
    $region73: #{bert_classifier_forward.1} parent=1 // pred_fallthru
      _
    // Predicated region
    $region74: #{bert_classifier_forward.1} parent=1 // pred_check
      _
    $region75: #{bert_classifier_forward.1} parent=1 // pred_check_branch
      %65 = sbr.rel (0) target = $region77
    $region76: #{bert_classifier_forward.1} parent=1 // pred_region
      _
    $region77: #{bert_classifier_forward.1} parent=1 // pred_fallthru
      _
    // Predicated region
    $region78: #{bert_classifier_forward.1} parent=1 // pred_check
      _
    $region79: #{bert_classifier_forward.1} parent=1 // pred_check_branch
      %67 = sbr.rel (0) target = $region81
    $region80: #{bert_classifier_forward.1} parent=1 // pred_region
      _
    $region81: #{bert_classifier_forward.1} parent=1 // pred_fallthru
      _
    // Predicated region
    $region82: #{bert_classifier_forward.1} parent=1 // pred_check
      _
    $region83: #{bert_classifier_forward.1} parent=1 // pred_check_branch
      %69 = sbr.rel (0) target = $region85
    $region84: #{bert_classifier_forward.1} parent=1 // pred_region
      _
    $region85: #{bert_classifier_forward.1} parent=1 // pred_fallthru
      _
    // Predicated region
    $region86: #{bert_classifier_forward.1} parent=1 // pred_check
      _
    $region87: #{bert_classifier_forward.1} parent=1 // pred_check_branch
      %71 = sbr.rel (0) target = $region89
    $region88: #{bert_classifier_forward.1} parent=1 // pred_region
      _
    $region89: #{bert_classifier_forward.1} parent=1 // pred_fallthru
      _
    %v73 = vld [vmem:[%s0] sm:$0xff]
    %v74 = vld [vmem:[%s0 + $0x8] sm:$0xff]
    %v75 = vld [vmem:[%s2] sm:$0x1]
    %v76 = vld [vmem:[%s3] sm:$0x1]
    %vm77 = vcmask 261120
    %v78 = vsel %vm77, %v73, 0.0
    %79 = vadd.xlane.f32.xlu0 %v78
    %v80 = vpop.xlane.xlu0 %79
    %v81 = vsel %vm77, %v74, 0.0
    %82 = vadd.xlane.f32.xlu0 %v81
    %v83 = vpop.xlane.xlu0 %82
    %v84 = vrcp.pop 32.0
    %v85 = vmul.f32 %v80, %v84
    %v86 = vmul.f32 %v83, %v84
    %v87 = vsub.f32 %v73, %v85
    %v88 = vsub.f32 %v74, %v86
    %v89 = vmul.f32 %v87, %v87
    %v90 = vmul.f32 %v88, %v88
    %v91 = vsel %vm77, %v89, 0.0
    %92 = vadd.xlane.f32.xlu0 %v91
    %v93 = vpop.xlane.xlu0 %92
    %v94 = vsel %vm77, %v90, 0.0
    %95 = vadd.xlane.f32.xlu0 %v94
    %v96 = vpop.xlane.xlu0 %95
    %v97 = vmul.f32 %v93, %v84
    %v98 = vmul.f32 %v96, %v84
    %v99 = vadd.f32 %v97, 1e-12
    %v100 = vadd.f32 %v98, 1e-12
    %v101 = vrsqrt.pop %v99
    %v102 = vrsqrt.pop %v100
    %v103 = vmul.f32 %v87, %v101
    %v104 = vmul.f32 %v88, %v102
    %v106 = vlaneseq
    %v107 = vshrl.u32 %v106, 7
    %v108 = vsub.s32 0, %v107
    %v109 = vrot.slane %v75, %v108
    %v111 = vmul.f32 %v103, %v109
    %v112 = vmul.f32 %v104, %v109
    %v114 = vlaneseq
    %v115 = vshrl.u32 %v114, 7
    %v116 = vsub.s32 0, %v115
    %v117 = vrot.slane %v76, %v116
    %v119 = vadd.f32 %v111, %v117
    %v120 = vadd.f32 %v112, %v117
    %v121 = vld [vmem:[%s1] sm:$0xff]
    %v122 = vld [vmem:[%s1 + $0x8] sm:$0xff]
    %v123 = vld [vmem:[%s4] sm:$0xf]
    %v124 = vld [vmem:[%s4 + $0x4] sm:$0xf]
    %v125 = vld [vmem:[%s4 + $0x8] sm:$0xf]
    %v126 = vld [vmem:[%s4 + $0xc] sm:$0xf]
    %v127 = vpack.c.bf16 %v120, %v119
    %v128 = vld [vmem:[%s5] sm:$0x1]
    %v130 = vlaneseq
    %v131 = vshrl.u32 %v130, 7
    %v132 = vsub.s32 0, %v131
    %v133 = vrot.slane %v128, %v132
    %v139 = vunpack.c.l.b16 %v123
    %v140 = vunpack.c.l.b16 %v124
    %v141 = vunpack.c.l.b16 %v125
    %v142 = vunpack.c.l.b16 %v126
    %v143 = vpack.c.b16 %v140, %v139
    %v144 = vpack.c.b16 %v142, %v141
    %v148 = vsel %vm77, %v127, 0
    %150 = vmatprep.subr.bf16.mxu0 0
    %151 = vmatpush1.bf16.msra.mxu0 %v143
    %152 = vmatprep.subr.bf16.mxu0 0
    %153 = vmatpush1.bf16.msra.mxu0 %v144
    %154 = vmatprep.subr.bf16.mxu0 0
    %155 = vmatpush1.bf16.msra.mxu0 0
    %156 = vmatprep.subr.bf16.mxu0 0
    %157 = vmatpush1.bf16.msra.mxu0 0
    %158 = vmatprep.subr.bf16.mxu0 0
    %159 = vmatpush1.bf16.msra.mxu0 0
    %160 = vmatprep.subr.bf16.mxu0 0
    %161 = vmatpush1.bf16.msra.mxu0 0
    %162 = vmatprep.subr.bf16.mxu0 0
    %163 = vmatpush1.bf16.msra.mxu0 0
    %164 = vmatprep.subr.bf16.mxu0 0
    %165 = vmatpush1.bf16.msra.mxu0 0
    %166 = vmatprep.subr.bf16.mxu0 0
    %167 = vmatpush1.bf16.msra.mxu0 0
    %168 = vmatprep.subr.bf16.mxu0 0
    %169 = vmatpush1.bf16.msra.mxu0 0
    %170 = vmatprep.subr.bf16.mxu0 0
    %171 = vmatpush1.bf16.msra.mxu0 0
    %172 = vmatprep.subr.bf16.mxu0 0
    %173 = vmatpush1.bf16.msra.mxu0 0
    %174 = vmatprep.subr.bf16.mxu0 0
    %175 = vmatpush1.bf16.msra.mxu0 0
    %176 = vmatprep.subr.bf16.mxu0 0
    %177 = vmatpush1.bf16.msra.mxu0 0
    %178 = vmatprep.subr.bf16.mxu0 0
    %179 = vmatpush1.bf16.msra.mxu0 0
    %180 = vmatprep.subr.bf16.mxu0 0
    %181 = vmatpush1.bf16.msra.mxu0 0
    %182 = vmatprep.mubr.bf16.mxu0 0
    %183 = vmatmul.mubr.bf16.gmra.mrb[0].mxu0 %v148
    %v184 = vpop.f32.mrb[0].mxu0
    %v185 = vadd.f32 %v133, %v184
    %v186 = vpop.f32.mrb[0].mxu0
    %v187 = vpop.f32.mrb[0].mxu0
    %v188 = vadd.f32 %v133, %v187
    %v189 = vpop.f32.mrb[0].mxu0
    %190 = vdwg.mxu0
    %v191 = vpack.c.bf16 %v188, %v185
    %193 = vrot.lane.b32.xlu0 %v191, 96
    %v194 = vpop.permute.xlu0 %193
    %vm195 = vcmask 130048
    %v197 = vsel %vm195, %v191, 0
    %v200 = vsel %vm195, %v194, 0
    %202 = vmatprep.subr.bf16.mxu0 0
    %203 = vmatpush1.bf16.xpose.msra.mxu0 %v200
    %204 = vmatprep.subr.bf16.mxu0 0
    %205 = vmatpush1.bf16.xpose.msra.mxu0 0
    %206 = vmatprep.subr.bf16.mxu0 0
    %207 = vmatpush1.bf16.xpose.msra.mxu0 0
    %208 = vmatprep.subr.bf16.mxu0 0
    %209 = vmatpush1.bf16.xpose.msra.mxu0 0
    %210 = vmatprep.subr.bf16.mxu0 0
    %211 = vmatpush1.bf16.xpose.msra.mxu0 0
    %212 = vmatprep.subr.bf16.mxu0 0
    %213 = vmatpush1.bf16.xpose.msra.mxu0 0
    %214 = vmatprep.subr.bf16.mxu0 0
    %215 = vmatpush1.bf16.xpose.msra.mxu0 0
    %216 = vmatprep.subr.bf16.mxu0 0
    %217 = vmatpush1.bf16.xpose.msra.mxu0 0
    %218 = vmatprep.subr.bf16.mxu0 0
    %219 = vmatpush1.bf16.xpose.msra.mxu0 0
    %220 = vmatprep.subr.bf16.mxu0 0
    %221 = vmatpush1.bf16.xpose.msra.mxu0 0
    %222 = vmatprep.subr.bf16.mxu0 0
    %223 = vmatpush1.bf16.xpose.msra.mxu0 0
    %224 = vmatprep.subr.bf16.mxu0 0
    %225 = vmatpush1.bf16.xpose.msra.mxu0 0
    %226 = vmatprep.subr.bf16.mxu0 0
    %227 = vmatpush1.bf16.xpose.msra.mxu0 0
    %228 = vmatprep.subr.bf16.mxu0 0
    %229 = vmatpush1.bf16.xpose.msra.mxu0 0
    %230 = vmatprep.subr.bf16.mxu0 0
    %231 = vmatpush1.bf16.xpose.msra.mxu0 0
    %232 = vmatprep.subr.bf16.mxu0 0
    %233 = vmatpush1.bf16.xpose.msra.mxu0 0
    %234 = vmatprep.mubr.bf16.mxu0 0
    %235 = vmatmul.mubr.bf16.gmra.mrb[0].mxu0 %v197
    %v236 = vpop.f32.mrb[0].mxu0
    %v237 = vadd.f32 0.0, %v236
    %v238 = vpop.f32.mrb[0].mxu0
    %v239 = vpop.f32.mrb[0].mxu0
    %v240 = vadd.f32 0.0, %v239
    %v241 = vpop.f32.mrb[0].mxu0
    %242 = vdwg.mxu0
    %v243 = vmul.f32 %v237, 0.25
    %v244 = vmul.f32 %v240, 0.25
    %v245 = vadd.f32 %v243, %v121
    %v246 = vadd.f32 %v244, %v122
    %v247 = vsel %vm195, %v245, -inf
    %248 = vmax.xlane.f32.xlu0 %v247
    %v249 = vpop.xlane.xlu0 %248
    %v250 = vsel %vm195, %v246, -inf
    %251 = vmax.xlane.f32.xlu0 %v250
    %v252 = vpop.xlane.xlu0 %251
    %v253 = vsub.f32 %v245, %v249
    %v254 = vsub.f32 %v246, %v252
    %v255 = vmul.f32 %v253, 1.442695
    %v256 = vpow.pop %v255
    %v257 = vmul.f32 %v254, 1.442695
    %v258 = vpow.pop %v257
    %v259 = vsel %vm195, %v256, 0.0
    %260 = vadd.xlane.f32.xlu0 %v259
    %v261 = vpop.xlane.xlu0 %260
    %v262 = vsel %vm195, %v258, 0.0
    %263 = vadd.xlane.f32.xlu0 %v262
    %v264 = vpop.xlane.xlu0 %263
    %v265 = vrcp.pop %v261
    %v266 = vrcp.pop %v264
    %v267 = vmul.f32 %v256, %v265
    %v268 = vmul.f32 %v258, %v266
    %v269 = vpack.c.bf16 %v268, %v267
    %270 = vrot.lane.b32.xlu0 %v191, 64
    %v271 = vpop.permute.xlu0 %270
    %v274 = vsel %vm195, %v269, 0
    %276 = vmatprep.subr.bf16.mxu0 0
    %277 = vmatpush1.bf16.msra.mxu0 %v271
    %278 = vmatprep.subr.bf16.mxu0 0
    %279 = vmatpush1.bf16.msra.mxu0 0
    %280 = vmatprep.subr.bf16.mxu0 0
    %281 = vmatpush1.bf16.msra.mxu0 0
    %282 = vmatprep.subr.bf16.mxu0 0
    %283 = vmatpush1.bf16.msra.mxu0 0
    %284 = vmatprep.subr.bf16.mxu0 0
    %285 = vmatpush1.bf16.msra.mxu0 0
    %286 = vmatprep.subr.bf16.mxu0 0
    %287 = vmatpush1.bf16.msra.mxu0 0
    %288 = vmatprep.subr.bf16.mxu0 0
    %289 = vmatpush1.bf16.msra.mxu0 0
    %290 = vmatprep.subr.bf16.mxu0 0
    %291 = vmatpush1.bf16.msra.mxu0 0
    %292 = vmatprep.subr.bf16.mxu0 0
    %293 = vmatpush1.bf16.msra.mxu0 0
    %294 = vmatprep.subr.bf16.mxu0 0
    %295 = vmatpush1.bf16.msra.mxu0 0
    %296 = vmatprep.subr.bf16.mxu0 0
    %297 = vmatpush1.bf16.msra.mxu0 0
    %298 = vmatprep.subr.bf16.mxu0 0
    %299 = vmatpush1.bf16.msra.mxu0 0
    %300 = vmatprep.subr.bf16.mxu0 0
    %301 = vmatpush1.bf16.msra.mxu0 0
    %302 = vmatprep.subr.bf16.mxu0 0
    %303 = vmatpush1.bf16.msra.mxu0 0
    %304 = vmatprep.subr.bf16.mxu0 0
    %305 = vmatpush1.bf16.msra.mxu0 0
    %306 = vmatprep.subr.bf16.mxu0 0
    %307 = vmatpush1.bf16.msra.mxu0 0
    %308 = vmatprep.mubr.bf16.mxu0 0
    %309 = vmatmul.mubr.bf16.gmra.mrb[0].mxu0 %v274
    %v310 = vpop.f32.mrb[0].mxu0
    %v311 = vadd.f32 0.0, %v310
    %v312 = vpop.f32.mrb[0].mxu0
    %v313 = vpop.f32.mrb[0].mxu0
    %v314 = vadd.f32 0.0, %v313
    %v315 = vpop.f32.mrb[0].mxu0
    %316 = vdwg.mxu0
    %317 = vrot.lane.b32.xlu0 %v191, 112
    %v318 = vpop.permute.xlu0 %317
    %319 = vrot.lane.b32.xlu0 %v191, 80
    %v320 = vpop.permute.xlu0 %319
    %v322 = vsel %vm195, %v318, 0
    %v325 = vsel %vm195, %v320, 0
    %327 = vmatprep.subr.bf16.mxu0 0
    %328 = vmatpush1.bf16.xpose.msra.mxu0 %v325
    %329 = vmatprep.subr.bf16.mxu0 0
    %330 = vmatpush1.bf16.xpose.msra.mxu0 0
    %331 = vmatprep.subr.bf16.mxu0 0
    %332 = vmatpush1.bf16.xpose.msra.mxu0 0
    %333 = vmatprep.subr.bf16.mxu0 0
    %334 = vmatpush1.bf16.xpose.msra.mxu0 0
    %335 = vmatprep.subr.bf16.mxu0 0
    %336 = vmatpush1.bf16.xpose.msra.mxu0 0
    %337 = vmatprep.subr.bf16.mxu0 0
    %338 = vmatpush1.bf16.xpose.msra.mxu0 0
    %339 = vmatprep.subr.bf16.mxu0 0
    %340 = vmatpush1.bf16.xpose.msra.mxu0 0
    %341 = vmatprep.subr.bf16.mxu0 0
    %342 = vmatpush1.bf16.xpose.msra.mxu0 0
    %343 = vmatprep.subr.bf16.mxu0 0
    %344 = vmatpush1.bf16.xpose.msra.mxu0 0
    %345 = vmatprep.subr.bf16.mxu0 0
    %346 = vmatpush1.bf16.xpose.msra.mxu0 0
    %347 = vmatprep.subr.bf16.mxu0 0
    %348 = vmatpush1.bf16.xpose.msra.mxu0 0
    %349 = vmatprep.subr.bf16.mxu0 0
    %350 = vmatpush1.bf16.xpose.msra.mxu0 0
    %351 = vmatprep.subr.bf16.mxu0 0
    %352 = vmatpush1.bf16.xpose.msra.mxu0 0
    %353 = vmatprep.subr.bf16.mxu0 0
    %354 = vmatpush1.bf16.xpose.msra.mxu0 0
    %355 = vmatprep.subr.bf16.mxu0 0
    %356 = vmatpush1.bf16.xpose.msra.mxu0 0
    %357 = vmatprep.subr.bf16.mxu0 0
    %358 = vmatpush1.bf16.xpose.msra.mxu0 0
    %359 = vmatprep.mubr.bf16.mxu0 0
    %360 = vmatmul.mubr.bf16.gmra.mrb[0].mxu0 %v322
    %v361 = vpop.f32.mrb[0].mxu0
    %v362 = vadd.f32 0.0, %v361
    %v363 = vpop.f32.mrb[0].mxu0
    %v364 = vpop.f32.mrb[0].mxu0
    %v365 = vadd.f32 0.0, %v364
    %v366 = vpop.f32.mrb[0].mxu0
    %367 = vdwg.mxu0
    %v368 = vmul.f32 %v362, 0.25
    %v369 = vmul.f32 %v365, 0.25
    %v370 = vadd.f32 %v368, %v121
    %v371 = vadd.f32 %v369, %v122
    %v372 = vsel %vm195, %v370, -inf
    %373 = vmax.xlane.f32.xlu0 %v372
    %v374 = vpop.xlane.xlu0 %373
    %v375 = vsel %vm195, %v371, -inf
    %376 = vmax.xlane.f32.xlu0 %v375
    %v377 = vpop.xlane.xlu0 %376
    %v378 = vsub.f32 %v370, %v374
    %v379 = vsub.f32 %v371, %v377
    %v380 = vmul.f32 %v378, 1.442695
    %v381 = vpow.pop %v380
    %v382 = vmul.f32 %v379, 1.442695
    %v383 = vpow.pop %v382
    %v384 = vsel %vm195, %v381, 0.0
    %385 = vadd.xlane.f32.xlu0 %v384
    %v386 = vpop.xlane.xlu0 %385
    %v387 = vsel %vm195, %v383, 0.0
    %388 = vadd.xlane.f32.xlu0 %v387
    %v389 = vpop.xlane.xlu0 %388
    %v390 = vrcp.pop %v386
    %v391 = vrcp.pop %v389
    %v392 = vmul.f32 %v381, %v390
    %v393 = vmul.f32 %v383, %v391
    %v394 = vpack.c.bf16 %v393, %v392
    %395 = vrot.lane.b32.xlu0 %v191, 48
    %v396 = vpop.permute.xlu0 %395
    %v399 = vsel %vm195, %v394, 0
    %401 = vmatprep.subr.bf16.mxu0 0
    %402 = vmatpush1.bf16.msra.mxu0 %v396
    %403 = vmatprep.subr.bf16.mxu0 0
    %404 = vmatpush1.bf16.msra.mxu0 0
    %405 = vmatprep.subr.bf16.mxu0 0
    %406 = vmatpush1.bf16.msra.mxu0 0
    %407 = vmatprep.subr.bf16.mxu0 0
    %408 = vmatpush1.bf16.msra.mxu0 0
    %409 = vmatprep.subr.bf16.mxu0 0
    %410 = vmatpush1.bf16.msra.mxu0 0
    %411 = vmatprep.subr.bf16.mxu0 0
    %412 = vmatpush1.bf16.msra.mxu0 0
    %413 = vmatprep.subr.bf16.mxu0 0
    %414 = vmatpush1.bf16.msra.mxu0 0
    %415 = vmatprep.subr.bf16.mxu0 0
    %416 = vmatpush1.bf16.msra.mxu0 0
    %417 = vmatprep.subr.bf16.mxu0 0
    %418 = vmatpush1.bf16.msra.mxu0 0
    %419 = vmatprep.subr.bf16.mxu0 0
    %420 = vmatpush1.bf16.msra.mxu0 0
    %421 = vmatprep.subr.bf16.mxu0 0
    %422 = vmatpush1.bf16.msra.mxu0 0
    %423 = vmatprep.subr.bf16.mxu0 0
    %424 = vmatpush1.bf16.msra.mxu0 0
    %425 = vmatprep.subr.bf16.mxu0 0
    %426 = vmatpush1.bf16.msra.mxu0 0
    %427 = vmatprep.subr.bf16.mxu0 0
    %428 = vmatpush1.bf16.msra.mxu0 0
    %429 = vmatprep.subr.bf16.mxu0 0
    %430 = vmatpush1.bf16.msra.mxu0 0
    %431 = vmatprep.subr.bf16.mxu0 0
    %432 = vmatpush1.bf16.msra.mxu0 0
    %433 = vmatprep.mubr.bf16.mxu0 0
    %434 = vmatmul.mubr.bf16.gmra.mrb[0].mxu0 %v399
    %v435 = vpop.f32.mrb[0].mxu0
    %v436 = vadd.f32 0.0, %v435
    %v437 = vpop.f32.mrb[0].mxu0
    %v438 = vpop.f32.mrb[0].mxu0
    %v439 = vadd.f32 0.0, %v438
    %v440 = vpop.f32.mrb[0].mxu0
    %441 = vdwg.mxu0
    %444 = vrot.lane.b32.xlu0 %v436, 16
    %v445 = vpop.permute.xlu0 %444
    %446 = vrot.lane.b32.xlu0 %v439, 16
    %v447 = vpop.permute.xlu0 %446
    %v450 = vsel %vm195, %v311, %v445
    %v451 = vsel %vm195, %v314, %v447
    %v452 = vld [vmem:[%s6] sm:$0xf]
    %v453 = vld [vmem:[%s6 + $0x4] sm:$0xf]
    %v454 = vld [vmem:[%s6 + $0x8] sm:$0xf]
    %v455 = vld [vmem:[%s6 + $0xc] sm:$0xf]
    %v456 = vpack.c.bf16 %v451, %v450
    %v457 = vld [vmem:[%s7] sm:$0x1]
    %v459 = vlaneseq
    %v460 = vshrl.u32 %v459, 7
    %v461 = vsub.s32 0, %v460
    %v462 = vrot.slane %v457, %v461
    %v468 = vunpack.c.l.b16 %v452
    %v469 = vunpack.c.l.b16 %v453
    %v470 = vunpack.c.l.b16 %v454
    %v471 = vunpack.c.l.b16 %v455
    %v472 = vpack.c.b16 %v469, %v468
    %v473 = vpack.c.b16 %v471, %v470
    %v477 = vsel %vm77, %v456, 0
    %479 = vmatprep.subr.bf16.mxu0 0
    %480 = vmatpush1.bf16.msra.mxu0 %v472
    %481 = vmatprep.subr.bf16.mxu0 0
    %482 = vmatpush1.bf16.msra.mxu0 %v473
    %483 = vmatprep.subr.bf16.mxu0 0
    %484 = vmatpush1.bf16.msra.mxu0 0
    %485 = vmatprep.subr.bf16.mxu0 0
    %486 = vmatpush1.bf16.msra.mxu0 0
    %487 = vmatprep.subr.bf16.mxu0 0
    %488 = vmatpush1.bf16.msra.mxu0 0
    %489 = vmatprep.subr.bf16.mxu0 0
    %490 = vmatpush1.bf16.msra.mxu0 0
    %491 = vmatprep.subr.bf16.mxu0 0
    %492 = vmatpush1.bf16.msra.mxu0 0
    %493 = vmatprep.subr.bf16.mxu0 0
    %494 = vmatpush1.bf16.msra.mxu0 0
    %495 = vmatprep.subr.bf16.mxu0 0
    %496 = vmatpush1.bf16.msra.mxu0 0
    %497 = vmatprep.subr.bf16.mxu0 0
    %498 = vmatpush1.bf16.msra.mxu0 0
    %499 = vmatprep.subr.bf16.mxu0 0
    %500 = vmatpush1.bf16.msra.mxu0 0
    %501 = vmatprep.subr.bf16.mxu0 0
    %502 = vmatpush1.bf16.msra.mxu0 0
    %503 = vmatprep.subr.bf16.mxu0 0
    %504 = vmatpush1.bf16.msra.mxu0 0
    %505 = vmatprep.subr.bf16.mxu0 0
    %506 = vmatpush1.bf16.msra.mxu0 0
    %507 = vmatprep.subr.bf16.mxu0 0
    %508 = vmatpush1.bf16.msra.mxu0 0
    %509 = vmatprep.subr.bf16.mxu0 0
    %510 = vmatpush1.bf16.msra.mxu0 0
    %511 = vmatprep.mubr.bf16.mxu0 0
    %512 = vmatmul.mubr.bf16.gmra.mrb[0].mxu0 %v477
    %v513 = vpop.f32.mrb[0].mxu0
    %v514 = vadd.f32 %v462, %v513
    %v515 = vpop.f32.mrb[0].mxu0
    %v516 = vpop.f32.mrb[0].mxu0
    %v517 = vadd.f32 %v462, %v516
    %v518 = vpop.f32.mrb[0].mxu0
    %519 = vdwg.mxu0
    %v520 = vadd.f32 %v119, %v514
    %v521 = vadd.f32 %v120, %v517
    %v522 = vld [vmem:[%s8] sm:$0x1]
    %v523 = vld [vmem:[%s9] sm:$0x1]
    %v524 = vsel %vm77, %v520, 0.0
    %525 = vadd.xlane.f32.xlu0 %v524
    %v526 = vpop.xlane.xlu0 %525
    %v527 = vsel %vm77, %v521, 0.0
    %528 = vadd.xlane.f32.xlu0 %v527
    %v529 = vpop.xlane.xlu0 %528
    %v530 = vmul.f32 %v526, %v84
    %v531 = vmul.f32 %v529, %v84
    %v532 = vsub.f32 %v520, %v530
    %v533 = vsub.f32 %v521, %v531
    %v534 = vmul.f32 %v532, %v532
    %v535 = vmul.f32 %v533, %v533
    %v536 = vsel %vm77, %v534, 0.0
    %537 = vadd.xlane.f32.xlu0 %v536
    %v538 = vpop.xlane.xlu0 %537
    %v539 = vsel %vm77, %v535, 0.0
    %540 = vadd.xlane.f32.xlu0 %v539
    %v541 = vpop.xlane.xlu0 %540
    %v542 = vmul.f32 %v538, %v84
    %v543 = vmul.f32 %v541, %v84
    %v544 = vadd.f32 %v542, 1e-12
    %v545 = vadd.f32 %v543, 1e-12
    %v546 = vrsqrt.pop %v544
    %v547 = vrsqrt.pop %v545
    %v548 = vmul.f32 %v532, %v546
    %v549 = vmul.f32 %v533, %v547
    %v551 = vlaneseq
    %v552 = vshrl.u32 %v551, 7
    %v553 = vsub.s32 0, %v552
    %v554 = vrot.slane %v522, %v553
    %v556 = vmul.f32 %v548, %v554
    %v557 = vmul.f32 %v549, %v554
    %v559 = vlaneseq
    %v560 = vshrl.u32 %v559, 7
    %v561 = vsub.s32 0, %v560
    %v562 = vrot.slane %v523, %v561
    %v564 = vadd.f32 %v556, %v562
    %v565 = vadd.f32 %v557, %v562
    %v566 = vld [vmem:[%s10] sm:$0xf]
    %v567 = vld [vmem:[%s10 + $0x4] sm:$0xf]
    %v568 = vld [vmem:[%s10 + $0x8] sm:$0xf]
    %v569 = vld [vmem:[%s10 + $0xc] sm:$0xf]
    %v570 = vpack.c.bf16 %v565, %v564
    %v571 = vld [vmem:[%s11] sm:$0x1]
    %v573 = vlaneseq
    %v574 = vshrl.u32 %v573, 7
    %v575 = vsub.s32 0, %v574
    %v576 = vrot.slane %v571, %v575
    %v582 = vunpack.c.l.b16 %v566
    %v583 = vunpack.c.l.b16 %v567
    %v584 = vunpack.c.l.b16 %v568
    %v585 = vunpack.c.l.b16 %v569
    %v586 = vpack.c.b16 %v583, %v582
    %v587 = vpack.c.b16 %v585, %v584
    %v591 = vsel %vm77, %v570, 0
    %593 = vmatprep.subr.bf16.mxu0 0
    %594 = vmatpush1.bf16.msra.mxu0 %v586
    %595 = vmatprep.subr.bf16.mxu0 0
    %596 = vmatpush1.bf16.msra.mxu0 %v587
    %597 = vmatprep.subr.bf16.mxu0 0
    %598 = vmatpush1.bf16.msra.mxu0 0
    %599 = vmatprep.subr.bf16.mxu0 0
    %600 = vmatpush1.bf16.msra.mxu0 0
    %601 = vmatprep.subr.bf16.mxu0 0
    %602 = vmatpush1.bf16.msra.mxu0 0
    %603 = vmatprep.subr.bf16.mxu0 0
    %604 = vmatpush1.bf16.msra.mxu0 0
    %605 = vmatprep.subr.bf16.mxu0 0
    %606 = vmatpush1.bf16.msra.mxu0 0
    %607 = vmatprep.subr.bf16.mxu0 0
    %608 = vmatpush1.bf16.msra.mxu0 0
    %609 = vmatprep.subr.bf16.mxu0 0
    %610 = vmatpush1.bf16.msra.mxu0 0
    %611 = vmatprep.subr.bf16.mxu0 0
    %612 = vmatpush1.bf16.msra.mxu0 0
    %613 = vmatprep.subr.bf16.mxu0 0
    %614 = vmatpush1.bf16.msra.mxu0 0
    %615 = vmatprep.subr.bf16.mxu0 0
    %616 = vmatpush1.bf16.msra.mxu0 0
    %617 = vmatprep.subr.bf16.mxu0 0
    %618 = vmatpush1.bf16.msra.mxu0 0
    %619 = vmatprep.subr.bf16.mxu0 0
    %620 = vmatpush1.bf16.msra.mxu0 0
    %621 = vmatprep.subr.bf16.mxu0 0
    %622 = vmatpush1.bf16.msra.mxu0 0
    %623 = vmatprep.subr.bf16.mxu0 0
    %624 = vmatpush1.bf16.msra.mxu0 0
    %625 = vmatprep.mubr.bf16.mxu0 0
    %626 = vmatmul.mubr.bf16.gmra.mrb[0].mxu0 %v591
    %v627 = vpop.f32.mrb[0].mxu0
    %v628 = vadd.f32 %v576, %v627
    %v629 = vpop.f32.mrb[0].mxu0
    %v630 = vpop.f32.mrb[0].mxu0
    %v631 = vadd.f32 %v576, %v630
    %v632 = vpop.f32.mrb[0].mxu0
    %633 = vdwg.mxu0
    %v634 = vmul.f32 %v628, %v628
    %v635 = vmul.f32 %v631, %v631
    %v636 = vmul.f32 %v628, %v634
    %v637 = vmul.f32 %v631, %v635
    %v638 = vmul.f32 %v636, 0.044715
    %v639 = vmul.f32 %v637, 0.044715
    %v640 = vadd.f32 %v628, %v638
    %v641 = vadd.f32 %v631, %v639
    %v642 = vmul.f32 %v640, 0.7978846
    %v643 = vmul.f32 %v641, 0.7978846
    %v644 = vtanh.pop %v642
    %v645 = vtanh.pop %v643
    %v646 = vadd.f32 %v644, 1.0
    %v647 = vadd.f32 %v645, 1.0
    %v648 = vmul.f32 %v646, 0.5
    %v649 = vmul.f32 %v647, 0.5
    %v650 = vmul.f32 %v628, %v648
    %v651 = vmul.f32 %v631, %v649
    %v652 = vld [vmem:[%s12] sm:$0xf]
    %v653 = vld [vmem:[%s12 + $0x4] sm:$0xf]
    %v654 = vld [vmem:[%s12 + $0x8] sm:$0xf]
    %v655 = vld [vmem:[%s12 + $0xc] sm:$0xf]
    %v656 = vld [vmem:[%s12 + $0x10] sm:$0xf]
    %v657 = vld [vmem:[%s12 + $0x14] sm:$0xf]
    %v658 = vld [vmem:[%s12 + $0x18] sm:$0xf]
    %v659 = vld [vmem:[%s12 + $0x1c] sm:$0xf]
    %v660 = vpack.c.bf16 %v651, %v650
    %v661 = vld [vmem:[%s13] sm:$0x1]
    %v663 = vlaneseq
    %v664 = vshrl.u32 %v663, 7
    %v665 = vsub.s32 0, %v664
    %v666 = vrot.slane %v661, %v665
    %v676 = vunpack.c.l.b16 %v652
    %v677 = vunpack.c.l.b16 %v653
    %v678 = vunpack.c.l.b16 %v654
    %v679 = vunpack.c.l.b16 %v655
    %v680 = vunpack.c.l.b16 %v656
    %v681 = vunpack.c.l.b16 %v657
    %v682 = vunpack.c.l.b16 %v658
    %v683 = vunpack.c.l.b16 %v659
    %v684 = vpack.c.b16 %v677, %v676
    %v685 = vpack.c.b16 %v679, %v678
    %v686 = vpack.c.b16 %v681, %v680
    %v687 = vpack.c.b16 %v683, %v682
    %vm692 = vcmask 523264
    %v694 = vsel %vm692, %v660, 0
    %696 = vmatprep.subr.bf16.mxu0 0
    %697 = vmatpush1.bf16.msra.mxu0 %v684
    %698 = vmatprep.subr.bf16.mxu0 0
    %699 = vmatpush1.bf16.msra.mxu0 %v685
    %700 = vmatprep.subr.bf16.mxu0 0
    %701 = vmatpush1.bf16.msra.mxu0 %v686
    %702 = vmatprep.subr.bf16.mxu0 0
    %703 = vmatpush1.bf16.msra.mxu0 %v687
    %704 = vmatprep.subr.bf16.mxu0 0
    %705 = vmatpush1.bf16.msra.mxu0 0
    %706 = vmatprep.subr.bf16.mxu0 0
    %707 = vmatpush1.bf16.msra.mxu0 0
    %708 = vmatprep.subr.bf16.mxu0 0
    %709 = vmatpush1.bf16.msra.mxu0 0
    %710 = vmatprep.subr.bf16.mxu0 0
    %711 = vmatpush1.bf16.msra.mxu0 0
    %712 = vmatprep.subr.bf16.mxu0 0
    %713 = vmatpush1.bf16.msra.mxu0 0
    %714 = vmatprep.subr.bf16.mxu0 0
    %715 = vmatpush1.bf16.msra.mxu0 0
    %716 = vmatprep.subr.bf16.mxu0 0
    %717 = vmatpush1.bf16.msra.mxu0 0
    %718 = vmatprep.subr.bf16.mxu0 0
    %719 = vmatpush1.bf16.msra.mxu0 0
    %720 = vmatprep.subr.bf16.mxu0 0
    %721 = vmatpush1.bf16.msra.mxu0 0
    %722 = vmatprep.subr.bf16.mxu0 0
    %723 = vmatpush1.bf16.msra.mxu0 0
    %724 = vmatprep.subr.bf16.mxu0 0
    %725 = vmatpush1.bf16.msra.mxu0 0
    %726 = vmatprep.subr.bf16.mxu0 0
    %727 = vmatpush1.bf16.msra.mxu0 0
    %728 = vmatprep.mubr.bf16.mxu0 0
    %729 = vmatmul.mubr.bf16.gmra.mrb[0].mxu0 %v694
    %v730 = vpop.f32.mrb[0].mxu0
    %v731 = vadd.f32 %v666, %v730
    %v732 = vpop.f32.mrb[0].mxu0
    %v733 = vpop.f32.mrb[0].mxu0
    %v734 = vadd.f32 %v666, %v733
    %v735 = vpop.f32.mrb[0].mxu0
    %736 = vdwg.mxu0
    %v737 = vadd.f32 %v564, %v731
    %v738 = vadd.f32 %v565, %v734
    %v739 = vld [vmem:[%s14] sm:$0x1]
    %v740 = vld [vmem:[%s15] sm:$0x1]
    %v741 = vsel %vm77, %v737, 0.0
    %742 = vadd.xlane.f32.xlu0 %v741
    %v743 = vpop.xlane.xlu0 %742
    %v744 = vsel %vm77, %v738, 0.0
    %745 = vadd.xlane.f32.xlu0 %v744
    %v746 = vpop.xlane.xlu0 %745
    %v747 = vmul.f32 %v743, %v84
    %v748 = vmul.f32 %v746, %v84
    %v749 = vsub.f32 %v737, %v747
    %v750 = vsub.f32 %v738, %v748
    %v751 = vmul.f32 %v749, %v749
    %v752 = vmul.f32 %v750, %v750
    %v753 = vsel %vm77, %v751, 0.0
    %754 = vadd.xlane.f32.xlu0 %v753
    %v755 = vpop.xlane.xlu0 %754
    %v756 = vsel %vm77, %v752, 0.0
    %757 = vadd.xlane.f32.xlu0 %v756
    %v758 = vpop.xlane.xlu0 %757
    %v759 = vmul.f32 %v755, %v84
    %v760 = vmul.f32 %v758, %v84
    %v761 = vadd.f32 %v759, 1e-12
    %v762 = vadd.f32 %v760, 1e-12
    %v763 = vrsqrt.pop %v761
    %v764 = vrsqrt.pop %v762
    %v765 = vmul.f32 %v749, %v763
    %v766 = vmul.f32 %v750, %v764
    %v768 = vlaneseq
    %v769 = vshrl.u32 %v768, 7
    %v770 = vsub.s32 0, %v769
    %v771 = vrot.slane %v739, %v770
    %v773 = vmul.f32 %v765, %v771
    %v774 = vmul.f32 %v766, %v771
    %v776 = vlaneseq
    %v777 = vshrl.u32 %v776, 7
    %v778 = vsub.s32 0, %v777
    %v779 = vrot.slane %v740, %v778
    %v781 = vadd.f32 %v773, %v779
    %v782 = vadd.f32 %v774, %v779
    %s783 = scalar_lea.vmem %s4, 16
    %v784 = vld [vmem:[%s783] sm:$0xf]
    %v785 = vld [vmem:[%s783 + $0x4] sm:$0xf]
    %v786 = vld [vmem:[%s783 + $0x8] sm:$0xf]
    %v787 = vld [vmem:[%s783 + $0xc] sm:$0xf]
    %v788 = vpack.c.bf16 %v782, %v781
    %s789 = scalar_lea.vmem %s5, 1
    %v790 = vld [vmem:[%s789] sm:$0x1]
    %v792 = vlaneseq
    %v793 = vshrl.u32 %v792, 7
    %v794 = vsub.s32 0, %v793
    %v795 = vrot.slane %v790, %v794
    %v801 = vunpack.c.l.b16 %v784
    %v802 = vunpack.c.l.b16 %v785
    %v803 = vunpack.c.l.b16 %v786
    %v804 = vunpack.c.l.b16 %v787
    %v805 = vpack.c.b16 %v802, %v801
    %v806 = vpack.c.b16 %v804, %v803
    %v810 = vsel %vm77, %v788, 0
    %812 = vmatprep.subr.bf16.mxu0 0
    %813 = vmatpush1.bf16.msra.mxu0 %v805
    %814 = vmatprep.subr.bf16.mxu0 0
    %815 = vmatpush1.bf16.msra.mxu0 %v806
    %816 = vmatprep.subr.bf16.mxu0 0
    %817 = vmatpush1.bf16.msra.mxu0 0
    %818 = vmatprep.subr.bf16.mxu0 0
    %819 = vmatpush1.bf16.msra.mxu0 0
    %820 = vmatprep.subr.bf16.mxu0 0
    %821 = vmatpush1.bf16.msra.mxu0 0
    %822 = vmatprep.subr.bf16.mxu0 0
    %823 = vmatpush1.bf16.msra.mxu0 0
    %824 = vmatprep.subr.bf16.mxu0 0
    %825 = vmatpush1.bf16.msra.mxu0 0
    %826 = vmatprep.subr.bf16.mxu0 0
    %827 = vmatpush1.bf16.msra.mxu0 0
    %828 = vmatprep.subr.bf16.mxu0 0
    %829 = vmatpush1.bf16.msra.mxu0 0
    %830 = vmatprep.subr.bf16.mxu0 0
    %831 = vmatpush1.bf16.msra.mxu0 0
    %832 = vmatprep.subr.bf16.mxu0 0
    %833 = vmatpush1.bf16.msra.mxu0 0
    %834 = vmatprep.subr.bf16.mxu0 0
    %835 = vmatpush1.bf16.msra.mxu0 0
    %836 = vmatprep.subr.bf16.mxu0 0
    %837 = vmatpush1.bf16.msra.mxu0 0
    %838 = vmatprep.subr.bf16.mxu0 0
    %839 = vmatpush1.bf16.msra.mxu0 0
    %840 = vmatprep.subr.bf16.mxu0 0
    %841 = vmatpush1.bf16.msra.mxu0 0
    %842 = vmatprep.subr.bf16.mxu0 0
    %843 = vmatpush1.bf16.msra.mxu0 0
    %844 = vmatprep.mubr.bf16.mxu0 0
    %845 = vmatmul.mubr.bf16.gmra.mrb[0].mxu0 %v810
    %v846 = vpop.f32.mrb[0].mxu0
    %v847 = vadd.f32 %v795, %v846
    %v848 = vpop.f32.mrb[0].mxu0
    %v849 = vpop.f32.mrb[0].mxu0
    %v850 = vadd.f32 %v795, %v849
    %v851 = vpop.f32.mrb[0].mxu0
    %852 = vdwg.mxu0
    %v853 = vpack.c.bf16 %v850, %v847
    %855 = vrot.lane.b32.xlu0 %v853, 96
    %v856 = vpop.permute.xlu0 %855
    %v858 = vsel %vm195, %v853, 0
    %v861 = vsel %vm195, %v856, 0
    %863 = vmatprep.subr.bf16.mxu0 0
    %864 = vmatpush1.bf16.xpose.msra.mxu0 %v861
    %865 = vmatprep.subr.bf16.mxu0 0
    %866 = vmatpush1.bf16.xpose.msra.mxu0 0
    %867 = vmatprep.subr.bf16.mxu0 0
    %868 = vmatpush1.bf16.xpose.msra.mxu0 0
    %869 = vmatprep.subr.bf16.mxu0 0
    %870 = vmatpush1.bf16.xpose.msra.mxu0 0
    %871 = vmatprep.subr.bf16.mxu0 0
    %872 = vmatpush1.bf16.xpose.msra.mxu0 0
    %873 = vmatprep.subr.bf16.mxu0 0
    %874 = vmatpush1.bf16.xpose.msra.mxu0 0
    %875 = vmatprep.subr.bf16.mxu0 0
    %876 = vmatpush1.bf16.xpose.msra.mxu0 0
    %877 = vmatprep.subr.bf16.mxu0 0
    %878 = vmatpush1.bf16.xpose.msra.mxu0 0
    %879 = vmatprep.subr.bf16.mxu0 0
    %880 = vmatpush1.bf16.xpose.msra.mxu0 0
    %881 = vmatprep.subr.bf16.mxu0 0
    %882 = vmatpush1.bf16.xpose.msra.mxu0 0
    %883 = vmatprep.subr.bf16.mxu0 0
    %884 = vmatpush1.bf16.xpose.msra.mxu0 0
    %885 = vmatprep.subr.bf16.mxu0 0
    %886 = vmatpush1.bf16.xpose.msra.mxu0 0
    %887 = vmatprep.subr.bf16.mxu0 0
    %888 = vmatpush1.bf16.xpose.msra.mxu0 0
    %889 = vmatprep.subr.bf16.mxu0 0
    %890 = vmatpush1.bf16.xpose.msra.mxu0 0
    %891 = vmatprep.subr.bf16.mxu0 0
    %892 = vmatpush1.bf16.xpose.msra.mxu0 0
    %893 = vmatprep.subr.bf16.mxu0 0
    %894 = vmatpush1.bf16.xpose.msra.mxu0 0
    %895 = vmatprep.mubr.bf16.mxu0 0
    %896 = vmatmul.mubr.bf16.gmra.mrb[0].mxu0 %v858
    %v897 = vpop.f32.mrb[0].mxu0
    %v898 = vadd.f32 0.0, %v897
    %v899 = vpop.f32.mrb[0].mxu0
    %v900 = vpop.f32.mrb[0].mxu0
    %v901 = vadd.f32 0.0, %v900
    %v902 = vpop.f32.mrb[0].mxu0
    %903 = vdwg.mxu0
    %v904 = vmul.f32 %v898, 0.25
    %v905 = vmul.f32 %v901, 0.25
    %v906 = vadd.f32 %v904, %v121
    %v907 = vadd.f32 %v905, %v122
    %v908 = vsel %vm195, %v906, -inf
    %909 = vmax.xlane.f32.xlu0 %v908
    %v910 = vpop.xlane.xlu0 %909
    %v911 = vsel %vm195, %v907, -inf
    %912 = vmax.xlane.f32.xlu0 %v911
    %v913 = vpop.xlane.xlu0 %912
    %v914 = vsub.f32 %v906, %v910
    %v915 = vsub.f32 %v907, %v913
    %v916 = vmul.f32 %v914, 1.442695
    %v917 = vpow.pop %v916
    %v918 = vmul.f32 %v915, 1.442695
    %v919 = vpow.pop %v918
    %v920 = vsel %vm195, %v917, 0.0
    %921 = vadd.xlane.f32.xlu0 %v920
    %v922 = vpop.xlane.xlu0 %921
    %v923 = vsel %vm195, %v919, 0.0
    %924 = vadd.xlane.f32.xlu0 %v923
    %v925 = vpop.xlane.xlu0 %924
    %v926 = vrcp.pop %v922
    %v927 = vrcp.pop %v925
    %v928 = vmul.f32 %v917, %v926
    %v929 = vmul.f32 %v919, %v927
    %v930 = vpack.c.bf16 %v929, %v928
    %931 = vrot.lane.b32.xlu0 %v853, 64
    %v932 = vpop.permute.xlu0 %931
    %v935 = vsel %vm195, %v930, 0
    %937 = vmatprep.subr.bf16.mxu0 0
    %938 = vmatpush1.bf16.msra.mxu0 %v932
    %939 = vmatprep.subr.bf16.mxu0 0
    %940 = vmatpush1.bf16.msra.mxu0 0
    %941 = vmatprep.subr.bf16.mxu0 0
    %942 = vmatpush1.bf16.msra.mxu0 0
    %943 = vmatprep.subr.bf16.mxu0 0
    %944 = vmatpush1.bf16.msra.mxu0 0
    %945 = vmatprep.subr.bf16.mxu0 0
    %946 = vmatpush1.bf16.msra.mxu0 0
    %947 = vmatprep.subr.bf16.mxu0 0
    %948 = vmatpush1.bf16.msra.mxu0 0
    %949 = vmatprep.subr.bf16.mxu0 0
    %950 = vmatpush1.bf16.msra.mxu0 0
    %951 = vmatprep.subr.bf16.mxu0 0
    %952 = vmatpush1.bf16.msra.mxu0 0
    %953 = vmatprep.subr.bf16.mxu0 0
    %954 = vmatpush1.bf16.msra.mxu0 0
    %955 = vmatprep.subr.bf16.mxu0 0
    %956 = vmatpush1.bf16.msra.mxu0 0
    %957 = vmatprep.subr.bf16.mxu0 0
    %958 = vmatpush1.bf16.msra.mxu0 0
    %959 = vmatprep.subr.bf16.mxu0 0
    %960 = vmatpush1.bf16.msra.mxu0 0
    %961 = vmatprep.subr.bf16.mxu0 0
    %962 = vmatpush1.bf16.msra.mxu0 0
    %963 = vmatprep.subr.bf16.mxu0 0
    %964 = vmatpush1.bf16.msra.mxu0 0
    %965 = vmatprep.subr.bf16.mxu0 0
    %966 = vmatpush1.bf16.msra.mxu0 0
    %967 = vmatprep.subr.bf16.mxu0 0
    %968 = vmatpush1.bf16.msra.mxu0 0
    %969 = vmatprep.mubr.bf16.mxu0 0
    %970 = vmatmul.mubr.bf16.gmra.mrb[0].mxu0 %v935
    %v971 = vpop.f32.mrb[0].mxu0
    %v972 = vadd.f32 0.0, %v971
    %v973 = vpop.f32.mrb[0].mxu0
    %v974 = vpop.f32.mrb[0].mxu0
    %v975 = vadd.f32 0.0, %v974
    %v976 = vpop.f32.mrb[0].mxu0
    %977 = vdwg.mxu0
    %978 = vrot.lane.b32.xlu0 %v853, 112
    %v979 = vpop.permute.xlu0 %978
    %980 = vrot.lane.b32.xlu0 %v853, 80
    %v981 = vpop.permute.xlu0 %980
    %v983 = vsel %vm195, %v979, 0
    %v986 = vsel %vm195, %v981, 0
    %988 = vmatprep.subr.bf16.mxu0 0
    %989 = vmatpush1.bf16.xpose.msra.mxu0 %v986
    %990 = vmatprep.subr.bf16.mxu0 0
    %991 = vmatpush1.bf16.xpose.msra.mxu0 0
    %992 = vmatprep.subr.bf16.mxu0 0
    %993 = vmatpush1.bf16.xpose.msra.mxu0 0
    %994 = vmatprep.subr.bf16.mxu0 0
    %995 = vmatpush1.bf16.xpose.msra.mxu0 0
    %996 = vmatprep.subr.bf16.mxu0 0
    %997 = vmatpush1.bf16.xpose.msra.mxu0 0
    %998 = vmatprep.subr.bf16.mxu0 0
    %999 = vmatpush1.bf16.xpose.msra.mxu0 0
    %1000 = vmatprep.subr.bf16.mxu0 0
    %1001 = vmatpush1.bf16.xpose.msra.mxu0 0
    %1002 = vmatprep.subr.bf16.mxu0 0
    %1003 = vmatpush1.bf16.xpose.msra.mxu0 0
    %1004 = vmatprep.subr.bf16.mxu0 0
    %1005 = vmatpush1.bf16.xpose.msra.mxu0 0
    %1006 = vmatprep.subr.bf16.mxu0 0
    %1007 = vmatpush1.bf16.xpose.msra.mxu0 0
    %1008 = vmatprep.subr.bf16.mxu0 0
    %1009 = vmatpush1.bf16.xpose.msra.mxu0 0
    %1010 = vmatprep.subr.bf16.mxu0 0
    %1011 = vmatpush1.bf16.xpose.msra.mxu0 0
    %1012 = vmatprep.subr.bf16.mxu0 0
    %1013 = vmatpush1.bf16.xpose.msra.mxu0 0
    %1014 = vmatprep.subr.bf16.mxu0 0
    %1015 = vmatpush1.bf16.xpose.msra.mxu0 0
    %1016 = vmatprep.subr.bf16.mxu0 0
    %1017 = vmatpush1.bf16.xpose.msra.mxu0 0
    %1018 = vmatprep.subr.bf16.mxu0 0
    %1019 = vmatpush1.bf16.xpose.msra.mxu0 0
    %1020 = vmatprep.mubr.bf16.mxu0 0
    %1021 = vmatmul.mubr.bf16.gmra.mrb[0].mxu0 %v983
    %v1022 = vpop.f32.mrb[0].mxu0
    %v1023 = vadd.f32 0.0, %v1022
    %v1024 = vpop.f32.mrb[0].mxu0
    %v1025 = vpop.f32.mrb[0].mxu0
    %v1026 = vadd.f32 0.0, %v1025
    %v1027 = vpop.f32.mrb[0].mxu0
    %1028 = vdwg.mxu0
    %v1029 = vmul.f32 %v1023, 0.25
    %v1030 = vmul.f32 %v1026, 0.25
    %v1031 = vadd.f32 %v1029, %v121
    %v1032 = vadd.f32 %v1030, %v122
    %v1033 = vsel %vm195, %v1031, -inf
    %1034 = vmax.xlane.f32.xlu0 %v1033
    %v1035 = vpop.xlane.xlu0 %1034
    %v1036 = vsel %vm195, %v1032, -inf
    %1037 = vmax.xlane.f32.xlu0 %v1036
    %v1038 = vpop.xlane.xlu0 %1037
    %v1039 = vsub.f32 %v1031, %v1035
    %v1040 = vsub.f32 %v1032, %v1038
    %v1041 = vmul.f32 %v1039, 1.442695
    %v1042 = vpow.pop %v1041
    %v1043 = vmul.f32 %v1040, 1.442695
    %v1044 = vpow.pop %v1043
    %v1045 = vsel %vm195, %v1042, 0.0
    %1046 = vadd.xlane.f32.xlu0 %v1045
    %v1047 = vpop.xlane.xlu0 %1046
    %v1048 = vsel %vm195, %v1044, 0.0
    %1049 = vadd.xlane.f32.xlu0 %v1048
    %v1050 = vpop.xlane.xlu0 %1049
    %v1051 = vrcp.pop %v1047
    %v1052 = vrcp.pop %v1050
    %v1053 = vmul.f32 %v1042, %v1051
    %v1054 = vmul.f32 %v1044, %v1052
    %v1055 = vpack.c.bf16 %v1054, %v1053
    %1056 = vrot.lane.b32.xlu0 %v853, 48
    %v1057 = vpop.permute.xlu0 %1056
    %v1060 = vsel %vm195, %v1055, 0
    %1062 = vmatprep.subr.bf16.mxu0 0
    %1063 = vmatpush1.bf16.msra.mxu0 %v1057
    %1064 = vmatprep.subr.bf16.mxu0 0
    %1065 = vmatpush1.bf16.msra.mxu0 0
    %1066 = vmatprep.subr.bf16.mxu0 0
    %1067 = vmatpush1.bf16.msra.mxu0 0
    %1068 = vmatprep.subr.bf16.mxu0 0
    %1069 = vmatpush1.bf16.msra.mxu0 0
    %1070 = vmatprep.subr.bf16.mxu0 0
    %1071 = vmatpush1.bf16.msra.mxu0 0
    %1072 = vmatprep.subr.bf16.mxu0 0
    %1073 = vmatpush1.bf16.msra.mxu0 0
    %1074 = vmatprep.subr.bf16.mxu0 0
    %1075 = vmatpush1.bf16.msra.mxu0 0
    %1076 = vmatprep.subr.bf16.mxu0 0
    %1077 = vmatpush1.bf16.msra.mxu0 0
    %1078 = vmatprep.subr.bf16.mxu0 0
    %1079 = vmatpush1.bf16.msra.mxu0 0
    %1080 = vmatprep.subr.bf16.mxu0 0
    %1081 = vmatpush1.bf16.msra.mxu0 0
    %1082 = vmatprep.subr.bf16.mxu0 0
    %1083 = vmatpush1.bf16.msra.mxu0 0
    %1084 = vmatprep.subr.bf16.mxu0 0
    %1085 = vmatpush1.bf16.msra.mxu0 0
    %1086 = vmatprep.subr.bf16.mxu0 0
    %1087 = vmatpush1.bf16.msra.mxu0 0
    %1088 = vmatprep.subr.bf16.mxu0 0
    %1089 = vmatpush1.bf16.msra.mxu0 0
    %1090 = vmatprep.subr.bf16.mxu0 0
    %1091 = vmatpush1.bf16.msra.mxu0 0
    %1092 = vmatprep.subr.bf16.mxu0 0
    %1093 = vmatpush1.bf16.msra.mxu0 0
    %1094 = vmatprep.mubr.bf16.mxu0 0
    %1095 = vmatmul.mubr.bf16.gmra.mrb[0].mxu0 %v1060
    %v1096 = vpop.f32.mrb[0].mxu0
    %v1097 = vadd.f32 0.0, %v1096
    %v1098 = vpop.f32.mrb[0].mxu0
    %v1099 = vpop.f32.mrb[0].mxu0
    %v1100 = vadd.f32 0.0, %v1099
    %v1101 = vpop.f32.mrb[0].mxu0
    %1102 = vdwg.mxu0
    %1105 = vrot.lane.b32.xlu0 %v1097, 16
    %v1106 = vpop.permute.xlu0 %1105
    %1107 = vrot.lane.b32.xlu0 %v1100, 16
    %v1108 = vpop.permute.xlu0 %1107
    %v1111 = vsel %vm195, %v972, %v1106
    %v1112 = vsel %vm195, %v975, %v1108
    %s1113 = scalar_lea.vmem %s6, 16
    %v1114 = vld [vmem:[%s1113] sm:$0xf]
    %v1115 = vld [vmem:[%s1113 + $0x4] sm:$0xf]
    %v1116 = vld [vmem:[%s1113 + $0x8] sm:$0xf]
    %v1117 = vld [vmem:[%s1113 + $0xc] sm:$0xf]
    %v1118 = vpack.c.bf16 %v1112, %v1111
    %s1119 = scalar_lea.vmem %s7, 1
    %v1120 = vld [vmem:[%s1119] sm:$0x1]
    %v1122 = vlaneseq
    %v1123 = vshrl.u32 %v1122, 7
    %v1124 = vsub.s32 0, %v1123
    %v1125 = vrot.slane %v1120, %v1124
    %v1131 = vunpack.c.l.b16 %v1114
    %v1132 = vunpack.c.l.b16 %v1115
    %v1133 = vunpack.c.l.b16 %v1116
    %v1134 = vunpack.c.l.b16 %v1117
    %v1135 = vpack.c.b16 %v1132, %v1131
    %v1136 = vpack.c.b16 %v1134, %v1133
    %v1140 = vsel %vm77, %v1118, 0
    %1142 = vmatprep.subr.bf16.mxu0 0
    %1143 = vmatpush1.bf16.msra.mxu0 %v1135
    %1144 = vmatprep.subr.bf16.mxu0 0
    %1145 = vmatpush1.bf16.msra.mxu0 %v1136
    %1146 = vmatprep.subr.bf16.mxu0 0
    %1147 = vmatpush1.bf16.msra.mxu0 0
    %1148 = vmatprep.subr.bf16.mxu0 0
    %1149 = vmatpush1.bf16.msra.mxu0 0
    %1150 = vmatprep.subr.bf16.mxu0 0
    %1151 = vmatpush1.bf16.msra.mxu0 0
    %1152 = vmatprep.subr.bf16.mxu0 0
    %1153 = vmatpush1.bf16.msra.mxu0 0
    %1154 = vmatprep.subr.bf16.mxu0 0
    %1155 = vmatpush1.bf16.msra.mxu0 0
    %1156 = vmatprep.subr.bf16.mxu0 0
    %1157 = vmatpush1.bf16.msra.mxu0 0
    %1158 = vmatprep.subr.bf16.mxu0 0
    %1159 = vmatpush1.bf16.msra.mxu0 0
    %1160 = vmatprep.subr.bf16.mxu0 0
    %1161 = vmatpush1.bf16.msra.mxu0 0
    %1162 = vmatprep.subr.bf16.mxu0 0
    %1163 = vmatpush1.bf16.msra.mxu0 0
    %1164 = vmatprep.subr.bf16.mxu0 0
    %1165 = vmatpush1.bf16.msra.mxu0 0
    %1166 = vmatprep.subr.bf16.mxu0 0
    %1167 = vmatpush1.bf16.msra.mxu0 0
    %1168 = vmatprep.subr.bf16.mxu0 0
    %1169 = vmatpush1.bf16.msra.mxu0 0
    %1170 = vmatprep.subr.bf16.mxu0 0
    %1171 = vmatpush1.bf16.msra.mxu0 0
    %1172 = vmatprep.subr.bf16.mxu0 0
    %1173 = vmatpush1.bf16.msra.mxu0 0
    %1174 = vmatprep.mubr.bf16.mxu0 0
    %1175 = vmatmul.mubr.bf16.gmra.mrb[0].mxu0 %v1140
    %v1176 = vpop.f32.mrb[0].mxu0
    %v1177 = vadd.f32 %v1125, %v1176
    %v1178 = vpop.f32.mrb[0].mxu0
    %v1179 = vpop.f32.mrb[0].mxu0
    %v1180 = vadd.f32 %v1125, %v1179
    %v1181 = vpop.f32.mrb[0].mxu0
    %1182 = vdwg.mxu0
    %v1183 = vadd.f32 %v781, %v1177
    %v1184 = vadd.f32 %v782, %v1180
    %s1185 = scalar_lea.vmem %s8, 1
    %v1186 = vld [vmem:[%s1185] sm:$0x1]
    %s1187 = scalar_lea.vmem %s9, 1
    %v1188 = vld [vmem:[%s1187] sm:$0x1]
    %v1189 = vsel %vm77, %v1183, 0.0
    %1190 = vadd.xlane.f32.xlu0 %v1189
    %v1191 = vpop.xlane.xlu0 %1190
    %v1192 = vsel %vm77, %v1184, 0.0
    %1193 = vadd.xlane.f32.xlu0 %v1192
    %v1194 = vpop.xlane.xlu0 %1193
    %v1195 = vmul.f32 %v1191, %v84
    %v1196 = vmul.f32 %v1194, %v84
    %v1197 = vsub.f32 %v1183, %v1195
    %v1198 = vsub.f32 %v1184, %v1196
    %v1199 = vmul.f32 %v1197, %v1197
    %v1200 = vmul.f32 %v1198, %v1198
    %v1201 = vsel %vm77, %v1199, 0.0
    %1202 = vadd.xlane.f32.xlu0 %v1201
    %v1203 = vpop.xlane.xlu0 %1202
    %v1204 = vsel %vm77, %v1200, 0.0
    %1205 = vadd.xlane.f32.xlu0 %v1204
    %v1206 = vpop.xlane.xlu0 %1205
    %v1207 = vmul.f32 %v1203, %v84
    %v1208 = vmul.f32 %v1206, %v84
    %v1209 = vadd.f32 %v1207, 1e-12
    %v1210 = vadd.f32 %v1208, 1e-12
    %v1211 = vrsqrt.pop %v1209
    %v1212 = vrsqrt.pop %v1210
    %v1213 = vmul.f32 %v1197, %v1211
    %v1214 = vmul.f32 %v1198, %v1212
    %v1216 = vlaneseq
    %v1217 = vshrl.u32 %v1216, 7
    %v1218 = vsub.s32 0, %v1217
    %v1219 = vrot.slane %v1186, %v1218
    %v1221 = vmul.f32 %v1213, %v1219
    %v1222 = vmul.f32 %v1214, %v1219
    %v1224 = vlaneseq
    %v1225 = vshrl.u32 %v1224, 7
    %v1226 = vsub.s32 0, %v1225
    %v1227 = vrot.slane %v1188, %v1226
    %v1229 = vadd.f32 %v1221, %v1227
    %v1230 = vadd.f32 %v1222, %v1227
    %s1231 = scalar_lea.vmem %s10, 16
    %v1232 = vld [vmem:[%s1231] sm:$0xf]
    %v1233 = vld [vmem:[%s1231 + $0x4] sm:$0xf]
    %v1234 = vld [vmem:[%s1231 + $0x8] sm:$0xf]
    %v1235 = vld [vmem:[%s1231 + $0xc] sm:$0xf]
    %v1236 = vpack.c.bf16 %v1230, %v1229
    %s1237 = scalar_lea.vmem %s11, 1
    %v1238 = vld [vmem:[%s1237] sm:$0x1]
    %v1240 = vlaneseq
    %v1241 = vshrl.u32 %v1240, 7
    %v1242 = vsub.s32 0, %v1241
    %v1243 = vrot.slane %v1238, %v1242
    %v1249 = vunpack.c.l.b16 %v1232
    %v1250 = vunpack.c.l.b16 %v1233
    %v1251 = vunpack.c.l.b16 %v1234
    %v1252 = vunpack.c.l.b16 %v1235
    %v1253 = vpack.c.b16 %v1250, %v1249
    %v1254 = vpack.c.b16 %v1252, %v1251
    %v1258 = vsel %vm77, %v1236, 0
    %1260 = vmatprep.subr.bf16.mxu0 0
    %1261 = vmatpush1.bf16.msra.mxu0 %v1253
    %1262 = vmatprep.subr.bf16.mxu0 0
    %1263 = vmatpush1.bf16.msra.mxu0 %v1254
    %1264 = vmatprep.subr.bf16.mxu0 0
    %1265 = vmatpush1.bf16.msra.mxu0 0
    %1266 = vmatprep.subr.bf16.mxu0 0
    %1267 = vmatpush1.bf16.msra.mxu0 0
    %1268 = vmatprep.subr.bf16.mxu0 0
    %1269 = vmatpush1.bf16.msra.mxu0 0
    %1270 = vmatprep.subr.bf16.mxu0 0
    %1271 = vmatpush1.bf16.msra.mxu0 0
    %1272 = vmatprep.subr.bf16.mxu0 0
    %1273 = vmatpush1.bf16.msra.mxu0 0
    %1274 = vmatprep.subr.bf16.mxu0 0
    %1275 = vmatpush1.bf16.msra.mxu0 0
    %1276 = vmatprep.subr.bf16.mxu0 0
    %1277 = vmatpush1.bf16.msra.mxu0 0
    %1278 = vmatprep.subr.bf16.mxu0 0
    %1279 = vmatpush1.bf16.msra.mxu0 0
    %1280 = vmatprep.subr.bf16.mxu0 0
    %1281 = vmatpush1.bf16.msra.mxu0 0
    %1282 = vmatprep.subr.bf16.mxu0 0
    %1283 = vmatpush1.bf16.msra.mxu0 0
    %1284 = vmatprep.subr.bf16.mxu0 0
    %1285 = vmatpush1.bf16.msra.mxu0 0
    %1286 = vmatprep.subr.bf16.mxu0 0
    %1287 = vmatpush1.bf16.msra.mxu0 0
    %1288 = vmatprep.subr.bf16.mxu0 0
    %1289 = vmatpush1.bf16.msra.mxu0 0
    %1290 = vmatprep.subr.bf16.mxu0 0
    %1291 = vmatpush1.bf16.msra.mxu0 0
    %1292 = vmatprep.mubr.bf16.mxu0 0
    %1293 = vmatmul.mubr.bf16.gmra.mrb[0].mxu0 %v1258
    %v1294 = vpop.f32.mrb[0].mxu0
    %v1295 = vadd.f32 %v1243, %v1294
    %v1296 = vpop.f32.mrb[0].mxu0
    %v1297 = vpop.f32.mrb[0].mxu0
    %v1298 = vadd.f32 %v1243, %v1297
    %v1299 = vpop.f32.mrb[0].mxu0
    %1300 = vdwg.mxu0
    %v1301 = vmul.f32 %v1295, %v1295
    %v1302 = vmul.f32 %v1298, %v1298
    %v1303 = vmul.f32 %v1295, %v1301
    %v1304 = vmul.f32 %v1298, %v1302
    %v1305 = vmul.f32 %v1303, 0.044715
    %v1306 = vmul.f32 %v1304, 0.044715
    %v1307 = vadd.f32 %v1295, %v1305
    %v1308 = vadd.f32 %v1298, %v1306
    %v1309 = vmul.f32 %v1307, 0.7978846
    %v1310 = vmul.f32 %v1308, 0.7978846
    %v1311 = vtanh.pop %v1309
    %v1312 = vtanh.pop %v1310
    %v1313 = vadd.f32 %v1311, 1.0
    %v1314 = vadd.f32 %v1312, 1.0
    %v1315 = vmul.f32 %v1313, 0.5
    %v1316 = vmul.f32 %v1314, 0.5
    %v1317 = vmul.f32 %v1295, %v1315
    %v1318 = vmul.f32 %v1298, %v1316
    %s1319 = scalar_lea.vmem %s12, 32
    %v1320 = vld [vmem:[%s1319] sm:$0xf]
    %v1321 = vld [vmem:[%s1319 + $0x4] sm:$0xf]
    %v1322 = vld [vmem:[%s1319 + $0x8] sm:$0xf]
    %v1323 = vld [vmem:[%s1319 + $0xc] sm:$0xf]
    %v1324 = vld [vmem:[%s1319 + $0x10] sm:$0xf]
    %v1325 = vld [vmem:[%s1319 + $0x14] sm:$0xf]
    %v1326 = vld [vmem:[%s1319 + $0x18] sm:$0xf]
    %v1327 = vld [vmem:[%s1319 + $0x1c] sm:$0xf]
    %v1328 = vpack.c.bf16 %v1318, %v1317
    %s1329 = scalar_lea.vmem %s13, 1
    %v1330 = vld [vmem:[%s1329] sm:$0x1]
    %v1332 = vlaneseq
    %v1333 = vshrl.u32 %v1332, 7
    %v1334 = vsub.s32 0, %v1333
    %v1335 = vrot.slane %v1330, %v1334
    %v1345 = vunpack.c.l.b16 %v1320
    %v1346 = vunpack.c.l.b16 %v1321
    %v1347 = vunpack.c.l.b16 %v1322
    %v1348 = vunpack.c.l.b16 %v1323
    %v1349 = vunpack.c.l.b16 %v1324
    %v1350 = vunpack.c.l.b16 %v1325
    %v1351 = vunpack.c.l.b16 %v1326
    %v1352 = vunpack.c.l.b16 %v1327
    %v1353 = vpack.c.b16 %v1346, %v1345
    %v1354 = vpack.c.b16 %v1348, %v1347
    %v1355 = vpack.c.b16 %v1350, %v1349
    %v1356 = vpack.c.b16 %v1352, %v1351
    %v1362 = vsel %vm692, %v1328, 0
    %1364 = vmatprep.subr.bf16.mxu0 0
    %1365 = vmatpush1.bf16.msra.mxu0 %v1353
    %1366 = vmatprep.subr.bf16.mxu0 0
    %1367 = vmatpush1.bf16.msra.mxu0 %v1354
    %1368 = vmatprep.subr.bf16.mxu0 0
    %1369 = vmatpush1.bf16.msra.mxu0 %v1355
    %1370 = vmatprep.subr.bf16.mxu0 0
    %1371 = vmatpush1.bf16.msra.mxu0 %v1356
    %1372 = vmatprep.subr.bf16.mxu0 0
    %1373 = vmatpush1.bf16.msra.mxu0 0
    %1374 = vmatprep.subr.bf16.mxu0 0
    %1375 = vmatpush1.bf16.msra.mxu0 0
    %1376 = vmatprep.subr.bf16.mxu0 0
    %1377 = vmatpush1.bf16.msra.mxu0 0
    %1378 = vmatprep.subr.bf16.mxu0 0
    %1379 = vmatpush1.bf16.msra.mxu0 0
    %1380 = vmatprep.subr.bf16.mxu0 0
    %1381 = vmatpush1.bf16.msra.mxu0 0
    %1382 = vmatprep.subr.bf16.mxu0 0
    %1383 = vmatpush1.bf16.msra.mxu0 0
    %1384 = vmatprep.subr.bf16.mxu0 0
    %1385 = vmatpush1.bf16.msra.mxu0 0
    %1386 = vmatprep.subr.bf16.mxu0 0
    %1387 = vmatpush1.bf16.msra.mxu0 0
    %1388 = vmatprep.subr.bf16.mxu0 0
    %1389 = vmatpush1.bf16.msra.mxu0 0
    %1390 = vmatprep.subr.bf16.mxu0 0
    %1391 = vmatpush1.bf16.msra.mxu0 0
    %1392 = vmatprep.subr.bf16.mxu0 0
    %1393 = vmatpush1.bf16.msra.mxu0 0
    %1394 = vmatprep.subr.bf16.mxu0 0
    %1395 = vmatpush1.bf16.msra.mxu0 0
    %1396 = vmatprep.mubr.bf16.mxu0 0
    %1397 = vmatmul.mubr.bf16.gmra.mrb[0].mxu0 %v1362
    %v1398 = vpop.f32.mrb[0].mxu0
    %v1399 = vadd.f32 %v1335, %v1398
    %v1400 = vpop.f32.mrb[0].mxu0
    %v1401 = vpop.f32.mrb[0].mxu0
    %v1402 = vadd.f32 %v1335, %v1401
    %v1403 = vpop.f32.mrb[0].mxu0
    %1404 = vdwg.mxu0
    %v1405 = vadd.f32 %v1229, %v1399
    %v1406 = vadd.f32 %v1230, %v1402
    %s1407 = scalar_lea.vmem %s14, 1
    %v1408 = vld [vmem:[%s1407] sm:$0x1]
    %s1409 = scalar_lea.vmem %s15, 1
    %v1410 = vld [vmem:[%s1409] sm:$0x1]
    %v1411 = vsel %vm77, %v1405, 0.0
    %1412 = vadd.xlane.f32.xlu0 %v1411
    %v1413 = vpop.xlane.xlu0 %1412
    %v1414 = vsel %vm77, %v1406, 0.0
    %1415 = vadd.xlane.f32.xlu0 %v1414
    %v1416 = vpop.xlane.xlu0 %1415
    %v1417 = vmul.f32 %v1413, %v84
    %v1418 = vmul.f32 %v1416, %v84
    %v1419 = vsub.f32 %v1405, %v1417
    %v1420 = vsub.f32 %v1406, %v1418
    %v1421 = vmul.f32 %v1419, %v1419
    %v1422 = vmul.f32 %v1420, %v1420
    %v1423 = vsel %vm77, %v1421, 0.0
    %1424 = vadd.xlane.f32.xlu0 %v1423
    %v1425 = vpop.xlane.xlu0 %1424
    %v1426 = vsel %vm77, %v1422, 0.0
    %1427 = vadd.xlane.f32.xlu0 %v1426
    %v1428 = vpop.xlane.xlu0 %1427
    %v1429 = vmul.f32 %v1425, %v84
    %v1430 = vmul.f32 %v1428, %v84
    %v1431 = vadd.f32 %v1429, 1e-12
    %v1432 = vadd.f32 %v1430, 1e-12
    %v1433 = vrsqrt.pop %v1431
    %v1434 = vrsqrt.pop %v1432
    %v1435 = vmul.f32 %v1419, %v1433
    %v1436 = vmul.f32 %v1420, %v1434
    %v1438 = vlaneseq
    %v1439 = vshrl.u32 %v1438, 7
    %v1440 = vsub.s32 0, %v1439
    %v1441 = vrot.slane %v1408, %v1440
    %v1443 = vmul.f32 %v1435, %v1441
    %v1444 = vmul.f32 %v1436, %v1441
    %v1446 = vlaneseq
    %v1447 = vshrl.u32 %v1446, 7
    %v1448 = vsub.s32 0, %v1447
    %v1449 = vrot.slane %v1410, %v1448
    %v1451 = vadd.f32 %v1443, %v1449
    %v1452 = vadd.f32 %v1444, %v1449
    %v1454 = vrot.slane %v1452, 7
    %vm1456 = vcmask 1040384
    %v1457 = vsel %vm1456, %v1451, %v1454
    %v1458 = vld [vmem:[%s16] sm:$0xf]
    %v1459 = vld [vmem:[%s16 + $0x4] sm:$0xf]
    %v1460 = vld [vmem:[%s16 + $0x8] sm:$0xf]
    %v1461 = vld [vmem:[%s16 + $0xc] sm:$0xf]
    %v1462 = vpack.c.bf16 %v1457, %v1457
    %v1463 = vld [vmem:[%s17] sm:$0x1]
    %v1465 = vlaneseq
    %v1466 = vshrl.u32 %v1465, 7
    %v1467 = vsub.s32 0, %v1466
    %v1468 = vrot.slane %v1463, %v1467
    %v1474 = vunpack.c.l.b16 %v1458
    %v1475 = vunpack.c.l.b16 %v1459
    %v1476 = vunpack.c.l.b16 %v1460
    %v1477 = vunpack.c.l.b16 %v1461
    %v1478 = vpack.c.b16 %v1475, %v1474
    %v1479 = vpack.c.b16 %v1477, %v1476
    %v1483 = vsel %vm77, %v1462, 0
    %1485 = vmatprep.subr.bf16.mxu0 0
    %1486 = vmatpush1.bf16.msra.mxu0 %v1478
    %1487 = vmatprep.subr.bf16.mxu0 0
    %1488 = vmatpush1.bf16.msra.mxu0 %v1479
    %1489 = vmatprep.subr.bf16.mxu0 0
    %1490 = vmatpush1.bf16.msra.mxu0 0
    %1491 = vmatprep.subr.bf16.mxu0 0
    %1492 = vmatpush1.bf16.msra.mxu0 0
    %1493 = vmatprep.subr.bf16.mxu0 0
    %1494 = vmatpush1.bf16.msra.mxu0 0
    %1495 = vmatprep.subr.bf16.mxu0 0
    %1496 = vmatpush1.bf16.msra.mxu0 0
    %1497 = vmatprep.subr.bf16.mxu0 0
    %1498 = vmatpush1.bf16.msra.mxu0 0
    %1499 = vmatprep.subr.bf16.mxu0 0
    %1500 = vmatpush1.bf16.msra.mxu0 0
    %1501 = vmatprep.subr.bf16.mxu0 0
    %1502 = vmatpush1.bf16.msra.mxu0 0
    %1503 = vmatprep.subr.bf16.mxu0 0
    %1504 = vmatpush1.bf16.msra.mxu0 0
    %1505 = vmatprep.subr.bf16.mxu0 0
    %1506 = vmatpush1.bf16.msra.mxu0 0
    %1507 = vmatprep.subr.bf16.mxu0 0
    %1508 = vmatpush1.bf16.msra.mxu0 0
    %1509 = vmatprep.subr.bf16.mxu0 0
    %1510 = vmatpush1.bf16.msra.mxu0 0
    %1511 = vmatprep.subr.bf16.mxu0 0
    %1512 = vmatpush1.bf16.msra.mxu0 0
    %1513 = vmatprep.subr.bf16.mxu0 0
    %1514 = vmatpush1.bf16.msra.mxu0 0
    %1515 = vmatprep.subr.bf16.mxu0 0
    %1516 = vmatpush1.bf16.msra.mxu0 0
    %1517 = vmatprep.mubr.bf16.mxu0 0
    %1518 = vmatmul.mubr.bf16.gmra.mrb[0].mxu0 %v1483
    %v1519 = vpop.f32.mrb[0].mxu0
    %v1520 = vadd.f32 %v1468, %v1519
    %v1521 = vpop.f32.mrb[0].mxu0
    %v1522 = vpop.f32.mrb[0].mxu0
    %v1523 = vpop.f32.mrb[0].mxu0
    %1524 = vdwg.mxu0
    %v1525 = vtanh.pop %v1520
    %v1526 = vld [vmem:[%s18] sm:$0xff]
    %v1527 = vld [vmem:[%s18 + $0x8] sm:$0xff]
    %v1528 = vld [vmem:[%s18 + $0x10] sm:$0xff]
    %v1529 = vld [vmem:[%s18 + $0x18] sm:$0xff]
    %v1530 = vpack.c.bf16 %v1525, %v1525
    %v1531 = vld [vmem:[%s19] sm:$0x3]
    %v1533 = vlaneseq
    %v1534 = vshrl.u32 %v1533, 7
    %v1535 = vsub.s32 0, %v1534
    %v1536 = vrot.slane %v1531, %v1535
    %v1537 = vlaneseq
    %v1538 = vshrl.u32 %v1537, 7
    %v1539 = vsub.s32 1, %v1538
    %v1540 = vrot.slane %v1531, %v1539
    %v1547 = vunpack.c.l.b16 %v1526
    %v1548 = vunpack.c.h.b16 %v1526
    %v1549 = vunpack.c.l.b16 %v1527
    %v1550 = vunpack.c.h.b16 %v1527
    %v1551 = vunpack.c.l.b16 %v1528
    %v1552 = vunpack.c.h.b16 %v1528
    %v1553 = vunpack.c.l.b16 %v1529
    %v1554 = vunpack.c.h.b16 %v1529
    %v1555 = vpack.c.b16 %v1549, %v1547
    %v1556 = vpack.c.b16 %v1550, %v1548
    %v1557 = vpack.c.b16 %v1553, %v1551
    %v1558 = vpack.c.b16 %v1554, %v1552
    %v1564 = vsel %vm77, %v1530, 0
    %1566 = vmatprep.subr.bf16.mxu0 %v1556
    %1567 = vmatpush1.bf16.msra.mxu0 %v1555
    %1568 = vmatprep.subr.bf16.mxu0 %v1558
    %1569 = vmatpush1.bf16.msra.mxu0 %v1557
    %1570 = vmatprep.subr.bf16.mxu0 0
    %1571 = vmatpush1.bf16.msra.mxu0 0
    %1572 = vmatprep.subr.bf16.mxu0 0
    %1573 = vmatpush1.bf16.msra.mxu0 0
    %1574 = vmatprep.subr.bf16.mxu0 0
    %1575 = vmatpush1.bf16.msra.mxu0 0
    %1576 = vmatprep.subr.bf16.mxu0 0
    %1577 = vmatpush1.bf16.msra.mxu0 0
    %1578 = vmatprep.subr.bf16.mxu0 0
    %1579 = vmatpush1.bf16.msra.mxu0 0
    %1580 = vmatprep.subr.bf16.mxu0 0
    %1581 = vmatpush1.bf16.msra.mxu0 0
    %1582 = vmatprep.subr.bf16.mxu0 0
    %1583 = vmatpush1.bf16.msra.mxu0 0
    %1584 = vmatprep.subr.bf16.mxu0 0
    %1585 = vmatpush1.bf16.msra.mxu0 0
    %1586 = vmatprep.subr.bf16.mxu0 0
    %1587 = vmatpush1.bf16.msra.mxu0 0
    %1588 = vmatprep.subr.bf16.mxu0 0
    %1589 = vmatpush1.bf16.msra.mxu0 0
    %1590 = vmatprep.subr.bf16.mxu0 0
    %1591 = vmatpush1.bf16.msra.mxu0 0
    %1592 = vmatprep.subr.bf16.mxu0 0
    %1593 = vmatpush1.bf16.msra.mxu0 0
    %1594 = vmatprep.subr.bf16.mxu0 0
    %1595 = vmatpush1.bf16.msra.mxu0 0
    %1596 = vmatprep.subr.bf16.mxu0 0
    %1597 = vmatpush1.bf16.msra.mxu0 0
    %1598 = vmatprep.mubr.bf16.mxu0 0
    %1599 = vmatmul.mubr.bf16.gmra.mrb[0].mxu0 %v1564
    %v1600 = vpop.f32.mrb[0].mxu0
    %v1601 = vadd.f32 %v1536, %v1600
    %v1602 = vpop.f32.mrb[0].mxu0
    %v1603 = vadd.f32 %v1540, %v1602
    %v1604 = vpop.f32.mrb[0].mxu0
    %v1605 = vpop.f32.mrb[0].mxu0
    %1606 = vdwg.mxu0
    %v1607 = vmax.f32 %v1601, 0.0
    %v1608 = vmax.f32 %v1603, 0.0
    %v1609 = vld [vmem:[%s20] sm:$0xf]
    %v1610 = vld [vmem:[%s20 + $0x4] sm:$0xf]
    %v1611 = vld [vmem:[%s20 + $0x8] sm:$0xf]
    %v1612 = vld [vmem:[%s20 + $0xc] sm:$0xf]
    %v1613 = vld [vmem:[%s20 + $0x10] sm:$0xf]
    %v1614 = vld [vmem:[%s20 + $0x14] sm:$0xf]
    %v1615 = vld [vmem:[%s20 + $0x18] sm:$0xf]
    %v1616 = vld [vmem:[%s20 + $0x1c] sm:$0xf]
    %v1617 = vld [vmem:[%s20 + $0x20] sm:$0xf]
    %v1618 = vld [vmem:[%s20 + $0x24] sm:$0xf]
    %v1619 = vld [vmem:[%s20 + $0x28] sm:$0xf]
    %v1620 = vld [vmem:[%s20 + $0x2c] sm:$0xf]
    %v1621 = vld [vmem:[%s20 + $0x30] sm:$0xf]
    %v1622 = vld [vmem:[%s20 + $0x34] sm:$0xf]
    %v1623 = vld [vmem:[%s20 + $0x38] sm:$0xf]
    %v1624 = vld [vmem:[%s20 + $0x3c] sm:$0xf]
    %v1625 = vld [vmem:[%s20 + $0x40] sm:$0xf]
    %v1626 = vld [vmem:[%s20 + $0x44] sm:$0xf]
    %v1627 = vld [vmem:[%s20 + $0x48] sm:$0xf]
    %v1628 = vld [vmem:[%s20 + $0x4c] sm:$0xf]
    %v1629 = vld [vmem:[%s20 + $0x50] sm:$0xf]
    %v1630 = vld [vmem:[%s20 + $0x54] sm:$0xf]
    %v1631 = vld [vmem:[%s20 + $0x58] sm:$0xf]
    %v1632 = vld [vmem:[%s20 + $0x5c] sm:$0xf]
    %v1633 = vld [vmem:[%s20 + $0x60] sm:$0xf]
    %v1634 = vld [vmem:[%s20 + $0x64] sm:$0xf]
    %v1635 = vld [vmem:[%s20 + $0x68] sm:$0xf]
    %v1636 = vld [vmem:[%s20 + $0x6c] sm:$0xf]
    %v1637 = vld [vmem:[%s20 + $0x70] sm:$0xf]
    %v1638 = vld [vmem:[%s20 + $0x74] sm:$0xf]
    %v1639 = vld [vmem:[%s20 + $0x78] sm:$0xf]
    %v1640 = vld [vmem:[%s20 + $0x7c] sm:$0xf]
    %v1641 = vpack.c.bf16 %v1607, %v1607
    %v1642 = vpack.c.bf16 %v1608, %v1608
    %v1643 = vld [vmem:[%s21] sm:$0x1]
    %v1645 = vlaneseq
    %v1646 = vshrl.u32 %v1645, 7
    %v1647 = vsub.s32 0, %v1646
    %v1648 = vrot.slane %v1643, %v1647
    %v1682 = vunpack.c.l.b16 %v1609
    %v1683 = vunpack.c.l.b16 %v1610
    %v1684 = vunpack.c.l.b16 %v1611
    %v1685 = vunpack.c.l.b16 %v1612
    %v1686 = vunpack.c.l.b16 %v1613
    %v1687 = vunpack.c.l.b16 %v1614
    %v1688 = vunpack.c.l.b16 %v1615
    %v1689 = vunpack.c.l.b16 %v1616
    %v1690 = vunpack.c.l.b16 %v1617
    %v1691 = vunpack.c.l.b16 %v1618
    %v1692 = vunpack.c.l.b16 %v1619
    %v1693 = vunpack.c.l.b16 %v1620
    %v1694 = vunpack.c.l.b16 %v1621
    %v1695 = vunpack.c.l.b16 %v1622
    %v1696 = vunpack.c.l.b16 %v1623
    %v1697 = vunpack.c.l.b16 %v1624
    %v1698 = vunpack.c.l.b16 %v1625
    %v1699 = vunpack.c.l.b16 %v1626
    %v1700 = vunpack.c.l.b16 %v1627
    %v1701 = vunpack.c.l.b16 %v1628
    %v1702 = vunpack.c.l.b16 %v1629
    %v1703 = vunpack.c.l.b16 %v1630
    %v1704 = vunpack.c.l.b16 %v1631
    %v1705 = vunpack.c.l.b16 %v1632
    %v1706 = vunpack.c.l.b16 %v1633
    %v1707 = vunpack.c.l.b16 %v1634
    %v1708 = vunpack.c.l.b16 %v1635
    %v1709 = vunpack.c.l.b16 %v1636
    %v1710 = vunpack.c.l.b16 %v1637
    %v1711 = vunpack.c.l.b16 %v1638
    %v1712 = vunpack.c.l.b16 %v1639
    %v1713 = vunpack.c.l.b16 %v1640
    %v1714 = vpack.c.b16 %v1683, %v1682
    %v1715 = vpack.c.b16 %v1685, %v1684
    %v1716 = vpack.c.b16 %v1687, %v1686
    %v1717 = vpack.c.b16 %v1689, %v1688
    %v1718 = vpack.c.b16 %v1691, %v1690
    %v1719 = vpack.c.b16 %v1693, %v1692
    %v1720 = vpack.c.b16 %v1695, %v1694
    %v1721 = vpack.c.b16 %v1697, %v1696
    %v1722 = vpack.c.b16 %v1699, %v1698
    %v1723 = vpack.c.b16 %v1701, %v1700
    %v1724 = vpack.c.b16 %v1703, %v1702
    %v1725 = vpack.c.b16 %v1705, %v1704
    %v1726 = vpack.c.b16 %v1707, %v1706
    %v1727 = vpack.c.b16 %v1709, %v1708
    %v1728 = vpack.c.b16 %v1711, %v1710
    %v1729 = vpack.c.b16 %v1713, %v1712
    %1746 = vmatprep.subr.bf16.mxu0 0
    %1747 = vmatpush1.bf16.msra.mxu0 %v1714
    %1748 = vmatprep.subr.bf16.mxu0 0
    %1749 = vmatpush1.bf16.msra.mxu0 %v1715
    %1750 = vmatprep.subr.bf16.mxu0 0
    %1751 = vmatpush1.bf16.msra.mxu0 %v1716
    %1752 = vmatprep.subr.bf16.mxu0 0
    %1753 = vmatpush1.bf16.msra.mxu0 %v1717
    %1754 = vmatprep.subr.bf16.mxu0 0
    %1755 = vmatpush1.bf16.msra.mxu0 %v1718
    %1756 = vmatprep.subr.bf16.mxu0 0
    %1757 = vmatpush1.bf16.msra.mxu0 %v1719
    %1758 = vmatprep.subr.bf16.mxu0 0
    %1759 = vmatpush1.bf16.msra.mxu0 %v1720
    %1760 = vmatprep.subr.bf16.mxu0 0
    %1761 = vmatpush1.bf16.msra.mxu0 %v1721
    %1762 = vmatprep.subr.bf16.mxu0 0
    %1763 = vmatpush1.bf16.msra.mxu0 %v1722
    %1764 = vmatprep.subr.bf16.mxu0 0
    %1765 = vmatpush1.bf16.msra.mxu0 %v1723
    %1766 = vmatprep.subr.bf16.mxu0 0
    %1767 = vmatpush1.bf16.msra.mxu0 %v1724
    %1768 = vmatprep.subr.bf16.mxu0 0
    %1769 = vmatpush1.bf16.msra.mxu0 %v1725
    %1770 = vmatprep.subr.bf16.mxu0 0
    %1771 = vmatpush1.bf16.msra.mxu0 %v1726
    %1772 = vmatprep.subr.bf16.mxu0 0
    %1773 = vmatpush1.bf16.msra.mxu0 %v1727
    %1774 = vmatprep.subr.bf16.mxu0 0
    %1775 = vmatpush1.bf16.msra.mxu0 %v1728
    %1776 = vmatprep.subr.bf16.mxu0 0
    %1777 = vmatpush1.bf16.msra.mxu0 %v1729
    %1778 = vmatprep.mubr.bf16.mxu0 %v1642
    %1779 = vmatmul.mubr.bf16.gmra.mrb[0].mxu0 %v1641
    %v1780 = vpop.f32.mrb[0].mxu0
    %v1781 = vadd.f32 %v1648, %v1780
    %v1782 = vpop.f32.mrb[0].mxu0
    %v1783 = vpop.f32.mrb[0].mxu0
    %v1784 = vpop.f32.mrb[0].mxu0
    %1785 = vdwg.mxu0
    %vm1786 = vcmask 17408
    %1787 = vst.msk [vmem:[#allocation2] sm:$0x3] %vm1786, %v1781
    // Predicated region
    $region90: #{bert_classifier_forward.1} parent=1 // pred_check
      _
    $region91: #{bert_classifier_forward.1} parent=1 // pred_check_branch
      %1789 = sbr.rel (0) target = $region93
    $region92: #{bert_classifier_forward.1} parent=1 // pred_region
      %s1791 = ssub.s32 32, 32
      %1792 = vsyncadd [#allocation3], %s1791
      %s1794 = sshll.u32 [#allocation2], 4
      %s1795 = int_to_ptr.vmem [resolvable:$true] %s1794
      %1797 = dma.vmem_to_hbm [thread:$0]  %s1795, 32, %s22, [#allocation3]
    $region93: #{bert_classifier_forward.1} parent=1 // pred_fallthru
      _
    // Predicated region
    $region94: #{bert_classifier_forward.1} parent=1 // pred_check
      _
    $region95: #{bert_classifier_forward.1} parent=1 // pred_check_branch
      %1799 = sbr.rel (0) target = $region97
    $region96: #{bert_classifier_forward.1} parent=1 // pred_region
      %1800 = dma.done [#allocation3], 32
    $region97: #{bert_classifier_forward.1} parent=1 // pred_fallthru
      _
    %1801 = vsyncpa [#allocation3], 1

</llo_original>
